<compile_context>
chip_gen: v7x
topology: tpu7x:2x2x1
jax: 0.10.0
libtpu: 0.0.40
codegen_flags: <defaults>
</compile_context>

<pallas_src>
import functools

import jax
import jax.numpy as jnp
from jax.experimental import pallas as pl
from jax.experimental.pallas import tpu as pltpu


# ---------------------------------------------------------------------------
# Helpers
# ---------------------------------------------------------------------------
def _round_up(x, m):
    return ((x + m - 1) // m) * m


def _hw_tile_config():
    """Per-generation tile budget.

    v5e/v6e: 128 MiB VMEM per TensorCore -> 512 tiles, 64 MiB scoped limit.
    v7x:      64 MiB VMEM per TensorCore -> halve tiles, 48 MiB limit.
    """
    max_tile, vmem_limit = 512, 64 * 1024 * 1024
    try:
        info = pltpu.get_tpu_info()
        vmem = getattr(info, "vmem_capacity_bytes", 128 * 1024 * 1024)
        if vmem <= 64 * 1024 * 1024:                 # v7x-class TensorCore
            max_tile, vmem_limit = 256, 48 * 1024 * 1024
    except Exception:                                # conservative fallback
        max_tile, vmem_limit = 256, 32 * 1024 * 1024
    return max_tile, vmem_limit


# ---------------------------------------------------------------------------
# Pallas kernels
# ---------------------------------------------------------------------------
def edge_agg_kernel(h_ref, x_ref, xe_ref, acc_ref):
    """Xe = H_s^T @ X   (grid = (edge tiles [parallel], node tiles [reduction]))."""
    @pl.when(pl.program_id(1) == 0)
    def _():
        acc_ref[...] = jnp.zeros_like(acc_ref)

    # Contract over the node axis of H_s directly - no transposed HT operand.
    acc_ref[...] += jax.lax.dot_general(
        h_ref[...], x_ref[...],
        dimension_numbers=(((0,), (0,)), ((), ())),
        preferred_element_type=jnp.float32)

    @pl.when(pl.program_id(1) == pl.num_programs(1) - 1)
    def _():
        xe_ref[...] = acc_ref[...].astype(xe_ref.dtype)


def vertex_update_kernel(h_ref, xe_ref, deg_v_ref, w_ref, b_ref, o_ref, acc_ref,
                         *, use_norm, apply_relu, apply_log_softmax, valid_out):
    """Y = epilogue( (degV * (H_s @ Xe)) @ W + b ).

    grid = (node tiles [parallel], edge tiles [reduction]); the full layer
    epilogue (norm, Linear, ReLU or fused log_softmax) runs at the last
    reduction step.
    """
    @pl.when(pl.program_id(1) == 0)
    def _():
        acc_ref[...] = jnp.zeros_like(acc_ref)

    acc_ref[...] += jnp.dot(h_ref[...], xe_ref[...],
                            preferred_element_type=jnp.float32)

    @pl.when(pl.program_id(1) == pl.num_programs(1) - 1)
    def _():
        xv = acc_ref[...] * deg_v_ref[...]                       # (tn, Cin) * (tn, 1)
        if use_norm:
            # normalize_l2 with inf -> 0 guard; rsqrt runs on the EUP.
            ss = jnp.sum(xv * xv, axis=1, keepdims=True)
            xv = xv * jnp.where(ss > 0.0, jax.lax.rsqrt(ss), 0.0)
        y = jnp.dot(xv.astype(jnp.bfloat16), w_ref[...],
                    preferred_element_type=jnp.float32)
        y = y + b_ref[...]                                        # (1, Cout) bcast
        if apply_relu:
            y = jnp.maximum(y, 0.0)
        if apply_log_softmax:
            # Mask padded class columns so they do not pollute the softmax sum.
            col = jax.lax.broadcasted_iota(jnp.int32, y.shape, 1)
            y = jnp.where(col < valid_out, y, -jnp.inf)
            m = jnp.max(y, axis=1, keepdims=True)
            z = y - m
            lse = jnp.log(jnp.sum(jnp.exp(z), axis=1, keepdims=True))
            y = z - lse
        o_ref[...] = y.astype(o_ref.dtype)


# ---------------------------------------------------------------------------
# pallas_call wrappers
# ---------------------------------------------------------------------------
def edge_aggregate(h_s, x, *, tile_n, tile_e, vmem_limit):
    n_pad, e_pad = h_s.shape
    c_pad = x.shape[1]
    grid = (e_pad // tile_e, n_pad // tile_n)
    return pl.pallas_call(
        edge_agg_kernel,
        out_shape=jax.ShapeDtypeStruct((e_pad, c_pad), jnp.bfloat16),
        grid_spec=pltpu.PrefetchScalarGridSpec(
            num_scalar_prefetch=0,
            grid=grid,
            in_specs=[
                pl.BlockSpec((tile_n, tile_e), lambda ei, nk: (nk, ei)),   # H_s tile
                pl.BlockSpec((tile_n, c_pad), lambda ei, nk: (nk, 0)),     # X tile
            ],
            out_specs=pl.BlockSpec((tile_e, c_pad), lambda ei, nk: (ei, 0)),
            scratch_shapes=[pltpu.VMEM((tile_e, c_pad), jnp.float32)],
        ),
        compiler_params=pltpu.CompilerParams(
            dimension_semantics=("parallel", "arbitrary"),
            vmem_limit_bytes=vmem_limit),
    )(h_s, x)


def vertex_update(h_s, xe, deg_v, w, b, *, tile_n, tile_e, use_norm, apply_relu,
                  apply_log_softmax, valid_out, out_dtype, vmem_limit):
    n_pad, e_pad = h_s.shape
    c_in_pad = xe.shape[1]
    c_out_pad = w.shape[1]
    grid = (n_pad // tile_n, e_pad // tile_e)
    kernel = functools.partial(
        vertex_update_kernel, use_norm=use_norm, apply_relu=apply_relu,
        apply_log_softmax=apply_log_softmax, valid_out=valid_out)
    return pl.pallas_call(
        kernel,
        out_shape=jax.ShapeDtypeStruct((n_pad, c_out_pad), out_dtype),
        grid_spec=pltpu.PrefetchScalarGridSpec(
            num_scalar_prefetch=0,
            grid=grid,
            in_specs=[
                pl.BlockSpec((tile_n, tile_e), lambda ni, ek: (ni, ek)),       # H_s
                pl.BlockSpec((tile_e, c_in_pad), lambda ni, ek: (ek, 0)),      # Xe
                pl.BlockSpec((tile_n, 1), lambda ni, ek: (ni, 0)),             # degV
                pl.BlockSpec((c_in_pad, c_out_pad), lambda ni, ek: (0, 0)),    # W (resident)
                pl.BlockSpec((1, c_out_pad), lambda ni, ek: (0, 0)),           # b (resident)
            ],
            out_specs=pl.BlockSpec((tile_n, c_out_pad), lambda ni, ek: (ni, 0)),
            scratch_shapes=[pltpu.VMEM((tile_n, c_in_pad), jnp.float32)],
        ),
        compiler_params=pltpu.CompilerParams(
            dimension_semantics=("parallel", "arbitrary"),
            vmem_limit_bytes=vmem_limit),
    )(h_s, xe, deg_v, w, b)


# ---------------------------------------------------------------------------
# Full forward pass
# ---------------------------------------------------------------------------
def unignn_forward(x, h, params, *, use_norm=True):
    """UniGNN(UniGCN2) forward: hidden convs (+ReLU) -> conv_out -> log_softmax.

    x: (N, nfeat) float32 node features.
    h: (N, E)     float32 dense binary incidence matrix.
    params: list of (W, b) per conv layer, W: (Cin, Cout), b: (1, Cout).
    """
    n, e = h.shape
    max_tile, vmem_limit = _hw_tile_config()
    tile_n = min(max_tile, _round_up(n, 128))
    tile_e = min(max_tile, _round_up(e, 128))
    n_pad = _round_up(n, tile_n)
    e_pad = _round_up(e, tile_e)

    h_p = jnp.zeros((n_pad, e_pad), jnp.float32).at[:n, :e].set(h.astype(jnp.float32))

    # --- UniGCN2 degree scalings, computed once and shared by all layers -----
    deg_v_raw = jnp.sum(h_p, axis=1, keepdims=True)                  # (Np,1)  d(v)
    edge_deg = jnp.sum(h_p, axis=0).reshape(-1, 1)                   # (Ep,1)  |e|
    sum_dv = jnp.einsum('ne,nc->ec', h_p, deg_v_raw)                 # (Ep,1)  sum_{v in e} d(v)
    safe_ed = jnp.maximum(edge_deg, 1.0)
    mean_dv = jnp.where(edge_deg > 0, sum_dv / safe_ed, 0.0)
    deg_e = jnp.where(mean_dv > 0, jax.lax.rsqrt(mean_dv), 0.0)      # degE = mean(d(v))^-1/2
    deg_v = jnp.where(deg_v_raw > 0, jax.lax.rsqrt(deg_v_raw), 0.0)  # degV = d(v)^-1/2
    # first_aggregate='mean' -> fold 1/|e| into the per-edge scale.
    scale_e = jnp.where(edge_deg > 0, deg_e / safe_ed, 0.0)          # (Ep,1)

    # Fold sqrt(scale_e) into H's columns once:
    #   H_s @ (H_s^T @ X) == H @ diag(scale_e) @ H^T @ X
    # so one bf16 copy of H serves both matmuls of every layer.
    h_s = (h_p * jnp.sqrt(scale_e).reshape(1, -1)).astype(jnp.bfloat16)

    c_in = x.shape[1]
    c_in_pad = _round_up(c_in, 128)
    x_cur = jnp.zeros((n_pad, c_in_pad), jnp.bfloat16).at[:n, :c_in].set(
        x.astype(jnp.bfloat16))

    n_layers = len(params)
    for i, (w, b) in enumerate(params):
        is_last = (i == n_layers - 1)
        ci, co = w.shape
        co_pad = _round_up(co, 128)
        w_p = jnp.zeros((x_cur.shape[1], co_pad), jnp.bfloat16).at[:ci, :co].set(
            w.astype(jnp.bfloat16))
        b_p = jnp.zeros((1, co_pad), jnp.float32).at[:, :co].set(
            b.reshape(1, -1).astype(jnp.float32))

        xe = edge_aggregate(h_s, x_cur, tile_n=tile_n, tile_e=tile_e,
                            vmem_limit=vmem_limit)
        x_cur = vertex_update(
            h_s, xe, deg_v, w_p, b_p,
            tile_n=tile_n, tile_e=tile_e,
            use_norm=use_norm,
            apply_relu=not is_last,                  # hidden layers: ReLU
            apply_log_softmax=is_last,               # final layer: fused log_softmax
            valid_out=co,
            out_dtype=jnp.float32 if is_last else jnp.bfloat16,
            vmem_limit=vmem_limit)

    c_out = params[-1][0].shape[1]
    return x_cur[:n, :c_out]


# ---------------------------------------------------------------------------
# Deterministic parameter construction (torch Linear-style init)
# ---------------------------------------------------------------------------
def init_linear(key, c_in, c_out):
    kw, kb = jax.random.split(key)
    bound = 1.0 / jnp.sqrt(float(c_in))
    w = jax.random.uniform(kw, (c_in, c_out), jnp.float32, -bound, bound)
    b = jax.random.uniform(kb, (1, c_out), jnp.float32, -bound, bound)
    return w, b


if __name__ == "__main__":
    # Small synthetic hypergraph / model config
    N, E = 16, 8          # |V|, |E|
    nfeat, nhid, nhead = 32, 8, 4
    nclass, nlayer = 4, 2

    key = jax.random.PRNGKey(0)
    k_h, k_x, k1, k2 = jax.random.split(key, 4)

    # Dense binary incidence matrix H (N, E); ensure every vertex and edge is used.
    h = (jax.random.uniform(k_h, (N, E)) < 0.4).astype(jnp.float32)
    h = h.at[jnp.arange(N), jnp.arange(N) % E].set(1.0)

    # Node features
    x = jax.random.normal(k_x, (N, nfeat), jnp.float32)

    # convs[0]: UniGCNConv2(nfeat -> nhead*nhid); conv_out: UniGCNConv2(nhid*nhead -> nclass)
    params = [
        init_linear(k1, nfeat, nhead * nhid),
        init_linear(k2, nhid * nhead, nclass),
    ]

    forward = jax.jit(functools.partial(unignn_forward, use_norm=True))
    out = jax.block_until_ready(forward(x, h, params))

    assert out.shape == (N, nclass)
    assert bool(jnp.all(jnp.isfinite(out)))
    # rows of log_softmax must sum (in prob space) to 1
    assert bool(jnp.allclose(jnp.sum(jnp.exp(out), axis=1), 1.0, atol=1e-4))

    print("KERNEL_OK")
</pallas_src>

<mosaic_0001>
module attributes {stable_mosaic.version = 11 : i64} {
  func.func @edge_agg_kernel(%arg0: i32, %arg1: i32, %arg2: memref<128x128xbf16, #tpu.memory_space<vmem>>, %arg3: memref<128x128xbf16, #tpu.memory_space<vmem>>, %arg4: memref<128x128xbf16, #tpu.memory_space<vmem>>, %arg5: memref<128x128xf32, #tpu.memory_space<vmem>>) attributes {dimension_semantics = [#tpu.dimension_semantics<parallel>, #tpu.dimension_semantics<arbitrary>], iteration_bounds = array<i64: 1, 1>, scalar_prefetch = 0 : i64, scratch_operands = 1 : i64, tpu.core_type = #tpu.core_type<tc>, window_params = [{transform_indices = @transform_0, window_bounds = array<i64: 128, 128>}, {transform_indices = @transform_1, window_bounds = array<i64: 128, 128>}, {transform_indices = @transform_2, window_bounds = array<i64: 128, 128>}]} {
    %c0_i32 = arith.constant 0 : i32
    %0 = arith.cmpi eq, %arg1, %c0_i32 : i32
    %1 = arith.extui %0 : i1 to i32
    %c0_i32_0 = arith.constant 0 : i32
    %2 = arith.cmpi ne, %1, %c0_i32_0 : i32
    scf.if %2 {
      %cst_10 = arith.constant 0.000000e+00 : f32
      %12 = vector.broadcast %cst_10 : f32 to vector<128x128xf32>
      %c0_11 = arith.constant 0 : index
      %c0_12 = arith.constant 0 : index
      %13 = vector.load %arg5[%c0_11, %c0_12] : memref<128x128xf32, #tpu.memory_space<vmem>>, vector<128x128xf32>
      tpu.vector_store %arg5[%c0_11, %c0_12], %12 {strides = array<i32>} : memref<128x128xf32, #tpu.memory_space<vmem>>, vector<128x128xf32>,
    } else {
    }
    %c0 = arith.constant 0 : index
    %c0_1 = arith.constant 0 : index
    %3 = vector.load %arg5[%c0, %c0_1] : memref<128x128xf32, #tpu.memory_space<vmem>>, vector<128x128xf32>
    %c0_2 = arith.constant 0 : index
    %c0_3 = arith.constant 0 : index
    %4 = vector.load %arg2[%c0_2, %c0_3] : memref<128x128xbf16, #tpu.memory_space<vmem>>, vector<128x128xbf16>
    %c0_4 = arith.constant 0 : index
    %c0_5 = arith.constant 0 : index
    %5 = vector.load %arg3[%c0_4, %c0_5] : memref<128x128xbf16, #tpu.memory_space<vmem>>, vector<128x128xbf16>
    %cst = arith.constant dense<0.000000e+00> : vector<128x128xf32>
    %6 = tpu.matmul %4, %5, %cst {dimension_numbers = #tpu.dot_dimension_numbers<[0], [0], [1], [1], [0, 1, 1, 1], [], []>} : vector<128x128xbf16>, vector<128x128xbf16>, vector<128x128xf32> -> vector<128x128xf32>
    %7 = arith.addf %3, %6 : vector<128x128xf32>
    %c0_6 = arith.constant 0 : index
    %c0_7 = arith.constant 0 : index
    %8 = vector.load %arg5[%c0_6, %c0_7] : memref<128x128xf32, #tpu.memory_space<vmem>>, vector<128x128xf32>
    tpu.vector_store %arg5[%c0_6, %c0_7], %7 {strides = array<i32>} : memref<128x128xf32, #tpu.memory_space<vmem>>, vector<128x128xf32>,
    %c0_i32_8 = arith.constant 0 : i32
    %9 = arith.cmpi eq, %arg1, %c0_i32_8 : i32
    %10 = arith.extui %9 : i1 to i32
    %c0_i32_9 = arith.constant 0 : i32
    %11 = arith.cmpi ne, %10, %c0_i32_9 : i32
    scf.if %11 {
      %c0_10 = arith.constant 0 : index
      %c0_11 = arith.constant 0 : index
      %12 = vector.load %arg5[%c0_10, %c0_11] : memref<128x128xf32, #tpu.memory_space<vmem>>, vector<128x128xf32>
      %13 = arith.truncf %12 : vector<128x128xf32> to vector<128x128xbf16>
      %c0_12 = arith.constant 0 : index
      %c0_13 = arith.constant 0 : index
      %14 = vector.load %arg4[%c0_12, %c0_13] : memref<128x128xbf16, #tpu.memory_space<vmem>>, vector<128x128xbf16>
      tpu.vector_store %arg4[%c0_12, %c0_13], %13 {strides = array<i32>} : memref<128x128xbf16, #tpu.memory_space<vmem>>, vector<128x128xbf16>,
    } else {
    }
    return
  }
  func.func @transform_0(%arg0: i32, %arg1: i32) -> (i32, i32) {
    %c0_i32 = arith.constant 0 : i32
    return %arg1, %arg0 : i32, i32
  }
  func.func @transform_1(%arg0: i32, %arg1: i32) -> (i32, i32) {
    %c0_i32 = arith.constant 0 : i32
    %c0_i32_0 = arith.constant 0 : i32
    return %arg1, %c0_i32 : i32, i32
  }
  func.func @transform_2(%arg0: i32, %arg1: i32) -> (i32, i32) {
    %c0_i32 = arith.constant 0 : i32
    %c0_i32_0 = arith.constant 0 : i32
    return %arg0, %c0_i32 : i32, i32
  }
}

module attributes {stable_mosaic.version = 11 : i64} {
  func.func @vertex_update_kernel(%arg0: i32, %arg1: i32, %arg2: memref<128x128xbf16, #tpu.memory_space<vmem>>, %arg3: memref<128x128xbf16, #tpu.memory_space<vmem>>, %arg4: memref<128x1xf32, #tpu.memory_space<vmem>>, %arg5: memref<128x128xbf16, #tpu.memory_space<vmem>>, %arg6: memref<1x128xf32, #tpu.memory_space<vmem>>, %arg7: memref<128x128xbf16, #tpu.memory_space<vmem>>, %arg8: memref<128x128xf32, #tpu.memory_space<vmem>>) attributes {dimension_semantics = [#tpu.dimension_semantics<parallel>, #tpu.dimension_semantics<arbitrary>], iteration_bounds = array<i64: 1, 1>, scalar_prefetch = 0 : i64, scratch_operands = 1 : i64, tpu.core_type = #tpu.core_type<tc>, window_params = [{transform_indices = @transform_0, window_bounds = array<i64: 128, 128>}, {transform_indices = @transform_1, window_bounds = array<i64: 128, 128>}, {transform_indices = @transform_2, window_bounds = array<i64: 128, 1>}, {pipeline_mode = #tpu.pipeline_mode<synchronous>, transform_indices = @transform_3, window_bounds = array<i64: 128, 128>}, {pipeline_mode = #tpu.pipeline_mode<synchronous>, transform_indices = @transform_4, window_bounds = array<i64: 1, 128>}, {transform_indices = @transform_5, window_bounds = array<i64: 128, 128>}]} {
    %c0_i32 = arith.constant 0 : i32
    %0 = arith.cmpi eq, %arg1, %c0_i32 : i32
    %1 = arith.extui %0 : i1 to i32
    %c0_i32_0 = arith.constant 0 : i32
    %2 = arith.cmpi ne, %1, %c0_i32_0 : i32
    scf.if %2 {
      %cst_10 = arith.constant 0.000000e+00 : f32
      %12 = vector.broadcast %cst_10 : f32 to vector<128x128xf32>
      %c0_11 = arith.constant 0 : index
      %c0_12 = arith.constant 0 : index
      %13 = vector.load %arg8[%c0_11, %c0_12] : memref<128x128xf32, #tpu.memory_space<vmem>>, vector<128x128xf32>
      tpu.vector_store %arg8[%c0_11, %c0_12], %12 {strides = array<i32>} : memref<128x128xf32, #tpu.memory_space<vmem>>, vector<128x128xf32>,
    } else {
    }
    %c0 = arith.constant 0 : index
    %c0_1 = arith.constant 0 : index
    %3 = vector.load %arg8[%c0, %c0_1] : memref<128x128xf32, #tpu.memory_space<vmem>>, vector<128x128xf32>
    %c0_2 = arith.constant 0 : index
    %c0_3 = arith.constant 0 : index
    %4 = vector.load %arg2[%c0_2, %c0_3] : memref<128x128xbf16, #tpu.memory_space<vmem>>, vector<128x128xbf16>
    %c0_4 = arith.constant 0 : index
    %c0_5 = arith.constant 0 : index
    %5 = vector.load %arg3[%c0_4, %c0_5] : memref<128x128xbf16, #tpu.memory_space<vmem>>, vector<128x128xbf16>
    %cst = arith.constant dense<0.000000e+00> : vector<128x128xf32>
    %6 = tpu.matmul %4, %5, %cst {dimension_numbers = #tpu.dot_dimension_numbers<[1], [0], [0], [1], [0, 0, 1, 1], [], []>} : vector<128x128xbf16>, vector<128x128xbf16>, vector<128x128xf32> -> vector<128x128xf32>
    %7 = arith.addf %3, %6 : vector<128x128xf32>
    %c0_6 = arith.constant 0 : index
    %c0_7 = arith.constant 0 : index
    %8 = vector.load %arg8[%c0_6, %c0_7] : memref<128x128xf32, #tpu.memory_space<vmem>>, vector<128x128xf32>
    tpu.vector_store %arg8[%c0_6, %c0_7], %7 {strides = array<i32>} : memref<128x128xf32, #tpu.memory_space<vmem>>, vector<128x128xf32>,
    %c0_i32_8 = arith.constant 0 : i32
    %9 = arith.cmpi eq, %arg1, %c0_i32_8 : i32
    %10 = arith.extui %9 : i1 to i32
    %c0_i32_9 = arith.constant 0 : i32
    %11 = arith.cmpi ne, %10, %c0_i32_9 : i32
    scf.if %11 {
      %c0_10 = arith.constant 0 : index
      %c0_11 = arith.constant 0 : index
      %12 = vector.load %arg8[%c0_10, %c0_11] : memref<128x128xf32, #tpu.memory_space<vmem>>, vector<128x128xf32>
      %c0_12 = arith.constant 0 : index
      %c0_13 = arith.constant 0 : index
      %13 = vector.load %arg4[%c0_12, %c0_13] : memref<128x1xf32, #tpu.memory_space<vmem>>, vector<128x1xf32>
      %14 = vector.broadcast %13 : vector<128x1xf32> to vector<128x128xf32>
      %15 = arith.mulf %12, %14 : vector<128x128xf32>
      %16 = arith.mulf %15, %15 : vector<128x128xf32>
      %cst_14 = arith.constant dense<0.000000e+00> : vector<128xf32>
      %17 = vector.multi_reduction <add>, %16, %cst_14 [1] : vector<128x128xf32> to vector<128xf32>
      %18 = vector.shape_cast %17 : vector<128xf32> to vector<128x1xf32>
      %cst_15 = arith.constant 0.000000e+00 : f32
      %19 = vector.broadcast %cst_15 : f32 to vector<128x1xf32>
      %20 = arith.cmpf ogt, %18, %19 : vector<128x1xf32>
      %21 = math.rsqrt %18 : vector<128x1xf32>
      %cst_16 = arith.constant 0.000000e+00 : f32
      %22 = vector.broadcast %cst_16 : f32 to vector<128x1xf32>
      %23 = arith.select %20, %21, %22 : vector<128x1xi1>, vector<128x1xf32>
      %24 = vector.broadcast %23 : vector<128x1xf32> to vector<128x128xf32>
      %25 = arith.mulf %15, %24 : vector<128x128xf32>
      %26 = arith.truncf %25 : vector<128x128xf32> to vector<128x128xbf16>
      %c0_17 = arith.constant 0 : index
      %c0_18 = arith.constant 0 : index
      %27 = vector.load %arg5[%c0_17, %c0_18] : memref<128x128xbf16, #tpu.memory_space<vmem>>, vector<128x128xbf16>
      %cst_19 = arith.constant dense<0.000000e+00> : vector<128x128xf32>
      %28 = tpu.matmul %26, %27, %cst_19 {dimension_numbers = #tpu.dot_dimension_numbers<[1], [0], [0], [1], [0, 0, 1, 1], [], []>} : vector<128x128xbf16>, vector<128x128xbf16>, vector<128x128xf32> -> vector<128x128xf32>
      %c0_20 = arith.constant 0 : index
      %c0_21 = arith.constant 0 : index
      %29 = vector.load %arg6[%c0_20, %c0_21] : memref<1x128xf32, #tpu.memory_space<vmem>>, vector<1x128xf32>
      %30 = vector.broadcast %29 : vector<1x128xf32> to vector<128x128xf32>
      %31 = arith.addf %28, %30 : vector<128x128xf32>
      %cst_22 = arith.constant 0.000000e+00 : f32
      %32 = vector.broadcast %cst_22 : f32 to vector<128x128xf32>
      %33 = arith.maximumf %31, %32 : vector<128x128xf32>
      %34 = arith.truncf %33 : vector<128x128xf32> to vector<128x128xbf16>
      %c0_23 = arith.constant 0 : index
      %c0_24 = arith.constant 0 : index
      %35 = vector.load %arg7[%c0_23, %c0_24] : memref<128x128xbf16, #tpu.memory_space<vmem>>, vector<128x128xbf16>
      tpu.vector_store %arg7[%c0_23, %c0_24], %34 {strides = array<i32>} : memref<128x128xbf16, #tpu.memory_space<vmem>>, vector<128x128xbf16>,
    } else {
    }
    return
  }
  func.func @transform_0(%arg0: i32, %arg1: i32) -> (i32, i32) {
    %c0_i32 = arith.constant 0 : i32
    return %arg0, %arg1 : i32, i32
  }
  func.func @transform_1(%arg0: i32, %arg1: i32) -> (i32, i32) {
    %c0_i32 = arith.constant 0 : i32
    %c0_i32_0 = arith.constant 0 : i32
    return %arg1, %c0_i32 : i32, i32
  }
  func.func @transform_2(%arg0: i32, %arg1: i32) -> (i32, i32) {
    %c0_i32 = arith.constant 0 : i32
    %c0_i32_0 = arith.constant 0 : i32
    return %arg0, %c0_i32 : i32, i32
  }
  func.func @transform_3(%arg0: i32, %arg1: i32) -> (i32, i32) {
    %c0_i32 = arith.constant 0 : i32
    %c0_i32_0 = arith.constant 0 : i32
    %c0_i32_1 = arith.constant 0 : i32
    return %c0_i32, %c0_i32_0 : i32, i32
  }
  func.func @transform_4(%arg0: i32, %arg1: i32) -> (i32, i32) {
    %c0_i32 = arith.constant 0 : i32
    %c0_i32_0 = arith.constant 0 : i32
    %c0_i32_1 = arith.constant 0 : i32
    return %c0_i32, %c0_i32_0 : i32, i32
  }
  func.func @transform_5(%arg0: i32, %arg1: i32) -> (i32, i32) {
    %c0_i32 = arith.constant 0 : i32
    %c0_i32_0 = arith.constant 0 : i32
    return %arg0, %c0_i32 : i32, i32
  }
}

module attributes {stable_mosaic.version = 11 : i64} {
  func.func @vertex_update_kernel(%arg0: i32, %arg1: i32, %arg2: memref<128x128xbf16, #tpu.memory_space<vmem>>, %arg3: memref<128x128xbf16, #tpu.memory_space<vmem>>, %arg4: memref<128x1xf32, #tpu.memory_space<vmem>>, %arg5: memref<128x128xbf16, #tpu.memory_space<vmem>>, %arg6: memref<1x128xf32, #tpu.memory_space<vmem>>, %arg7: memref<128x128xf32, #tpu.memory_space<vmem>>, %arg8: memref<128x128xf32, #tpu.memory_space<vmem>>) attributes {dimension_semantics = [#tpu.dimension_semantics<parallel>, #tpu.dimension_semantics<arbitrary>], iteration_bounds = array<i64: 1, 1>, scalar_prefetch = 0 : i64, scratch_operands = 1 : i64, tpu.core_type = #tpu.core_type<tc>, window_params = [{transform_indices = @transform_0, window_bounds = array<i64: 128, 128>}, {transform_indices = @transform_1, window_bounds = array<i64: 128, 128>}, {transform_indices = @transform_2, window_bounds = array<i64: 128, 1>}, {pipeline_mode = #tpu.pipeline_mode<synchronous>, transform_indices = @transform_3, window_bounds = array<i64: 128, 128>}, {pipeline_mode = #tpu.pipeline_mode<synchronous>, transform_indices = @transform_4, window_bounds = array<i64: 1, 128>}, {transform_indices = @transform_5, window_bounds = array<i64: 128, 128>}]} {
    %c0_i32 = arith.constant 0 : i32
    %0 = arith.cmpi eq, %arg1, %c0_i32 : i32
    %1 = arith.extui %0 : i1 to i32
    %c0_i32_0 = arith.constant 0 : i32
    %2 = arith.cmpi ne, %1, %c0_i32_0 : i32
    scf.if %2 {
      %cst_10 = arith.constant 0.000000e+00 : f32
      %12 = vector.broadcast %cst_10 : f32 to vector<128x128xf32>
      %c0_11 = arith.constant 0 : index
      %c0_12 = arith.constant 0 : index
      %13 = vector.load %arg8[%c0_11, %c0_12] : memref<128x128xf32, #tpu.memory_space<vmem>>, vector<128x128xf32>
      tpu.vector_store %arg8[%c0_11, %c0_12], %12 {strides = array<i32>} : memref<128x128xf32, #tpu.memory_space<vmem>>, vector<128x128xf32>,
    } else {
    }
    %c0 = arith.constant 0 : index
    %c0_1 = arith.constant 0 : index
    %3 = vector.load %arg8[%c0, %c0_1] : memref<128x128xf32, #tpu.memory_space<vmem>>, vector<128x128xf32>
    %c0_2 = arith.constant 0 : index
    %c0_3 = arith.constant 0 : index
    %4 = vector.load %arg2[%c0_2, %c0_3] : memref<128x128xbf16, #tpu.memory_space<vmem>>, vector<128x128xbf16>
    %c0_4 = arith.constant 0 : index
    %c0_5 = arith.constant 0 : index
    %5 = vector.load %arg3[%c0_4, %c0_5] : memref<128x128xbf16, #tpu.memory_space<vmem>>, vector<128x128xbf16>
    %cst = arith.constant dense<0.000000e+00> : vector<128x128xf32>
    %6 = tpu.matmul %4, %5, %cst {dimension_numbers = #tpu.dot_dimension_numbers<[1], [0], [0], [1], [0, 0, 1, 1], [], []>} : vector<128x128xbf16>, vector<128x128xbf16>, vector<128x128xf32> -> vector<128x128xf32>
    %7 = arith.addf %3, %6 : vector<128x128xf32>
    %c0_6 = arith.constant 0 : index
    %c0_7 = arith.constant 0 : index
    %8 = vector.load %arg8[%c0_6, %c0_7] : memref<128x128xf32, #tpu.memory_space<vmem>>, vector<128x128xf32>
    tpu.vector_store %arg8[%c0_6, %c0_7], %7 {strides = array<i32>} : memref<128x128xf32, #tpu.memory_space<vmem>>, vector<128x128xf32>,
    %c0_i32_8 = arith.constant 0 : i32
    %9 = arith.cmpi eq, %arg1, %c0_i32_8 : i32
    %10 = arith.extui %9 : i1 to i32
    %c0_i32_9 = arith.constant 0 : i32
    %11 = arith.cmpi ne, %10, %c0_i32_9 : i32
    scf.if %11 {
      %c0_10 = arith.constant 0 : index
      %c0_11 = arith.constant 0 : index
      %12 = vector.load %arg8[%c0_10, %c0_11] : memref<128x128xf32, #tpu.memory_space<vmem>>, vector<128x128xf32>
      %c0_12 = arith.constant 0 : index
      %c0_13 = arith.constant 0 : index
      %13 = vector.load %arg4[%c0_12, %c0_13] : memref<128x1xf32, #tpu.memory_space<vmem>>, vector<128x1xf32>
      %14 = vector.broadcast %13 : vector<128x1xf32> to vector<128x128xf32>
      %15 = arith.mulf %12, %14 : vector<128x128xf32>
      %16 = arith.mulf %15, %15 : vector<128x128xf32>
      %cst_14 = arith.constant dense<0.000000e+00> : vector<128xf32>
      %17 = vector.multi_reduction <add>, %16, %cst_14 [1] : vector<128x128xf32> to vector<128xf32>
      %18 = vector.shape_cast %17 : vector<128xf32> to vector<128x1xf32>
      %cst_15 = arith.constant 0.000000e+00 : f32
      %19 = vector.broadcast %cst_15 : f32 to vector<128x1xf32>
      %20 = arith.cmpf ogt, %18, %19 : vector<128x1xf32>
      %21 = math.rsqrt %18 : vector<128x1xf32>
      %cst_16 = arith.constant 0.000000e+00 : f32
      %22 = vector.broadcast %cst_16 : f32 to vector<128x1xf32>
      %23 = arith.select %20, %21, %22 : vector<128x1xi1>, vector<128x1xf32>
      %24 = vector.broadcast %23 : vector<128x1xf32> to vector<128x128xf32>
      %25 = arith.mulf %15, %24 : vector<128x128xf32>
      %26 = arith.truncf %25 : vector<128x128xf32> to vector<128x128xbf16>
      %c0_17 = arith.constant 0 : index
      %c0_18 = arith.constant 0 : index
      %27 = vector.load %arg5[%c0_17, %c0_18] : memref<128x128xbf16, #tpu.memory_space<vmem>>, vector<128x128xbf16>
      %cst_19 = arith.constant dense<0.000000e+00> : vector<128x128xf32>
      %28 = tpu.matmul %26, %27, %cst_19 {dimension_numbers = #tpu.dot_dimension_numbers<[1], [0], [0], [1], [0, 0, 1, 1], [], []>} : vector<128x128xbf16>, vector<128x128xbf16>, vector<128x128xf32> -> vector<128x128xf32>
      %c0_20 = arith.constant 0 : index
      %c0_21 = arith.constant 0 : index
      %29 = vector.load %arg6[%c0_20, %c0_21] : memref<1x128xf32, #tpu.memory_space<vmem>>, vector<1x128xf32>
      %30 = vector.broadcast %29 : vector<1x128xf32> to vector<128x128xf32>
      %31 = arith.addf %28, %30 : vector<128x128xf32>
      %32 = tpu.iota {dimensions = array<i32: 1>} : vector<128x128xi32>
      %c4_i32 = arith.constant 4 : i32
      %33 = vector.broadcast %c4_i32 : i32 to vector<128x128xi32>
      %34 = arith.cmpi slt, %32, %33 : vector<128x128xi32>
      %cst_22 = arith.constant 0xFF800000 : f32
      %35 = vector.broadcast %cst_22 : f32 to vector<128x128xf32>
      %36 = arith.select %34, %31, %35 : vector<128x128xi1>, vector<128x128xf32>
      %cst_23 = arith.constant dense<0xFF800000> : vector<128xf32>
      %37 = vector.multi_reduction <maximumf>, %36, %cst_23 [1] : vector<128x128xf32> to vector<128xf32>
      %38 = vector.shape_cast %37 : vector<128xf32> to vector<128x1xf32>
      %39 = vector.broadcast %38 : vector<128x1xf32> to vector<128x128xf32>
      %40 = arith.subf %36, %39 : vector<128x128xf32>
      %41 = math.exp %40 : vector<128x128xf32>
      %cst_24 = arith.constant dense<0.000000e+00> : vector<128xf32>
      %42 = vector.multi_reduction <add>, %41, %cst_24 [1] : vector<128x128xf32> to vector<128xf32>
      %43 = vector.shape_cast %42 : vector<128xf32> to vector<128x1xf32>
      %44 = math.log %43 : vector<128x1xf32>
      %45 = vector.broadcast %44 : vector<128x1xf32> to vector<128x128xf32>
      %46 = arith.subf %40, %45 : vector<128x128xf32>
      %c0_25 = arith.constant 0 : index
      %c0_26 = arith.constant 0 : index
      %47 = vector.load %arg7[%c0_25, %c0_26] : memref<128x128xf32, #tpu.memory_space<vmem>>, vector<128x128xf32>
      tpu.vector_store %arg7[%c0_25, %c0_26], %46 {strides = array<i32>} : memref<128x128xf32, #tpu.memory_space<vmem>>, vector<128x128xf32>,
    } else {
    }
    return
  }
  func.func @transform_0(%arg0: i32, %arg1: i32) -> (i32, i32) {
    %c0_i32 = arith.constant 0 : i32
    return %arg0, %arg1 : i32, i32
  }
  func.func @transform_1(%arg0: i32, %arg1: i32) -> (i32, i32) {
    %c0_i32 = arith.constant 0 : i32
    %c0_i32_0 = arith.constant 0 : i32
    return %arg1, %c0_i32 : i32, i32
  }
  func.func @transform_2(%arg0: i32, %arg1: i32) -> (i32, i32) {
    %c0_i32 = arith.constant 0 : i32
    %c0_i32_0 = arith.constant 0 : i32
    return %arg0, %c0_i32 : i32, i32
  }
  func.func @transform_3(%arg0: i32, %arg1: i32) -> (i32, i32) {
    %c0_i32 = arith.constant 0 : i32
    %c0_i32_0 = arith.constant 0 : i32
    %c0_i32_1 = arith.constant 0 : i32
    return %c0_i32, %c0_i32_0 : i32, i32
  }
  func.func @transform_4(%arg0: i32, %arg1: i32) -> (i32, i32) {
    %c0_i32 = arith.constant 0 : i32
    %c0_i32_0 = arith.constant 0 : i32
    %c0_i32_1 = arith.constant 0 : i32
    return %c0_i32, %c0_i32_0 : i32, i32
  }
  func.func @transform_5(%arg0: i32, %arg1: i32) -> (i32, i32) {
    %c0_i32 = arith.constant 0 : i32
    %c0_i32_0 = arith.constant 0 : i32
    return %arg0, %c0_i32 : i32, i32
  }
}

</mosaic_0001>

<llo_original>
// kernel: unignn_forward.4
$region0: #{unignn_forward.4}
  #allocation0 [shape = 'u32[]', space=smem, size = 0x4, offset = 0x4, fixed_abs, tag = 'smem constant byte address 0x4 - core index']
  #allocation1 [shape = 'u32[144,128]{1,0:T(1,128)}', space=vmem, size = 0x12000, scoped, tag = 'internal scratch']
  #allocation2 [shape = 'f32[128,128]{1,0:T(8,128)}', space=vmem, size = 0x10000, scoped, tag = 'scratch operand']
  %s0 = inlined_call_operand.vmem [shape: bf16[128,128], index: 0, kind: input, shape index: {}]
  %s1 = inlined_call_operand.vmem [shape: bf16[128,128], index: 1, kind: input, shape index: {}]
  %s2 = inlined_call_operand.vmem [shape: bf16[128,128], index: 2, kind: output, shape index: {}]
  %s3 = sld [smem:[#allocation0]]
  $region26: #{unignn_forward.4} parent=0
    _
  %s5 = ssub.s32 1, %s3
  %s6 = scalar_select 0, %s5, %s3
  // Predicated region
  $region2: #{unignn_forward.4} parent=0 // pred_check
    _
  $region3: #{unignn_forward.4} parent=0 // pred_check_branch
    %8 = sbr.rel (0) target = $region5
  $region4: #{unignn_forward.4} parent=0 // pred_region
    _
  $region5: #{unignn_forward.4} parent=0 // pred_fallthru
    _
  // Predicated region
  $region6: #{unignn_forward.4} parent=0 // pred_check
    _
  $region7: #{unignn_forward.4} parent=0 // pred_check_branch
    %10 = sbr.rel (0) target = $region9
  $region8: #{unignn_forward.4} parent=0 // pred_region
    _
  $region9: #{unignn_forward.4} parent=0 // pred_fallthru
    _
  %p12 = scmp.eq.s32.totalorder 0, 0
  // Predicated region
  $region10: #{unignn_forward.4} parent=0 // pred_check
    %p13 = pneg %p12
  $region11: #{unignn_forward.4} parent=0 // pred_check_branch
    %15 = sbr.rel (%p13) target = $region13
  $region12: #{unignn_forward.4} parent=0 // pred_region
    %16 = vst [vmem:[#allocation2] sm:$0xff] 0.0
    %17 = vst [vmem:[#allocation2 + $0x8] sm:$0xff] 0.0
    %18 = vst [vmem:[#allocation2 + $0x10] sm:$0xff] 0.0
    %19 = vst [vmem:[#allocation2 + $0x18] sm:$0xff] 0.0
    %20 = vst [vmem:[#allocation2 + $0x20] sm:$0xff] 0.0
    %21 = vst [vmem:[#allocation2 + $0x28] sm:$0xff] 0.0
    %22 = vst [vmem:[#allocation2 + $0x30] sm:$0xff] 0.0
    %23 = vst [vmem:[#allocation2 + $0x38] sm:$0xff] 0.0
    %24 = vst [vmem:[#allocation2 + $0x40] sm:$0xff] 0.0
    %25 = vst [vmem:[#allocation2 + $0x48] sm:$0xff] 0.0
    %26 = vst [vmem:[#allocation2 + $0x50] sm:$0xff] 0.0
    %27 = vst [vmem:[#allocation2 + $0x58] sm:$0xff] 0.0
    %28 = vst [vmem:[#allocation2 + $0x60] sm:$0xff] 0.0
    %29 = vst [vmem:[#allocation2 + $0x68] sm:$0xff] 0.0
    %30 = vst [vmem:[#allocation2 + $0x70] sm:$0xff] 0.0
    %31 = vst [vmem:[#allocation2 + $0x78] sm:$0xff] 0.0
  $region13: #{unignn_forward.4} parent=0 // pred_fallthru
    _
  %v32 = vld [vmem:[#allocation2] sm:$0xff]
  %v33 = vld [vmem:[#allocation2 + $0x8] sm:$0xff]
  %v34 = vld [vmem:[#allocation2 + $0x10] sm:$0xff]
  %v35 = vld [vmem:[#allocation2 + $0x18] sm:$0xff]
  %v36 = vld [vmem:[#allocation2 + $0x20] sm:$0xff]
  %v37 = vld [vmem:[#allocation2 + $0x28] sm:$0xff]
  %v38 = vld [vmem:[#allocation2 + $0x30] sm:$0xff]
  %v39 = vld [vmem:[#allocation2 + $0x38] sm:$0xff]
  %v40 = vld [vmem:[#allocation2 + $0x40] sm:$0xff]
  %v41 = vld [vmem:[#allocation2 + $0x48] sm:$0xff]
  %v42 = vld [vmem:[#allocation2 + $0x50] sm:$0xff]
  %v43 = vld [vmem:[#allocation2 + $0x58] sm:$0xff]
  %v44 = vld [vmem:[#allocation2 + $0x60] sm:$0xff]
  %v45 = vld [vmem:[#allocation2 + $0x68] sm:$0xff]
  %v46 = vld [vmem:[#allocation2 + $0x70] sm:$0xff]
  %v47 = vld [vmem:[#allocation2 + $0x78] sm:$0xff]
  %v48 = vld [vmem:[%s0] sm:$0xf]
  %v49 = vld [vmem:[%s0 + $0x4] sm:$0xf]
  %v50 = vld [vmem:[%s0 + $0x8] sm:$0xf]
  %v51 = vld [vmem:[%s0 + $0xc] sm:$0xf]
  %v52 = vld [vmem:[%s0 + $0x10] sm:$0xf]
  %v53 = vld [vmem:[%s0 + $0x14] sm:$0xf]
  %v54 = vld [vmem:[%s0 + $0x18] sm:$0xf]
  %v55 = vld [vmem:[%s0 + $0x1c] sm:$0xf]
  %v56 = vld [vmem:[%s0 + $0x20] sm:$0xf]
  %v57 = vld [vmem:[%s0 + $0x24] sm:$0xf]
  %v58 = vld [vmem:[%s0 + $0x28] sm:$0xf]
  %v59 = vld [vmem:[%s0 + $0x2c] sm:$0xf]
  %v60 = vld [vmem:[%s0 + $0x30] sm:$0xf]
  %v61 = vld [vmem:[%s0 + $0x34] sm:$0xf]
  %v62 = vld [vmem:[%s0 + $0x38] sm:$0xf]
  %v63 = vld [vmem:[%s0 + $0x3c] sm:$0xf]
  %v64 = vld [vmem:[%s1] sm:$0xf]
  %v65 = vld [vmem:[%s1 + $0x4] sm:$0xf]
  %v66 = vld [vmem:[%s1 + $0x8] sm:$0xf]
  %v67 = vld [vmem:[%s1 + $0xc] sm:$0xf]
  %v68 = vld [vmem:[%s1 + $0x10] sm:$0xf]
  %v69 = vld [vmem:[%s1 + $0x14] sm:$0xf]
  %v70 = vld [vmem:[%s1 + $0x18] sm:$0xf]
  %v71 = vld [vmem:[%s1 + $0x1c] sm:$0xf]
  %v72 = vld [vmem:[%s1 + $0x20] sm:$0xf]
  %v73 = vld [vmem:[%s1 + $0x24] sm:$0xf]
  %v74 = vld [vmem:[%s1 + $0x28] sm:$0xf]
  %v75 = vld [vmem:[%s1 + $0x2c] sm:$0xf]
  %v76 = vld [vmem:[%s1 + $0x30] sm:$0xf]
  %v77 = vld [vmem:[%s1 + $0x34] sm:$0xf]
  %v78 = vld [vmem:[%s1 + $0x38] sm:$0xf]
  %v79 = vld [vmem:[%s1 + $0x3c] sm:$0xf]
  %v96 = vunpack.c.l.b16 %v48
  %v97 = vunpack.c.l.b16 %v49
  %v98 = vunpack.c.l.b16 %v50
  %v99 = vunpack.c.l.b16 %v51
  %v100 = vunpack.c.l.b16 %v52
  %v101 = vunpack.c.l.b16 %v53
  %v102 = vunpack.c.l.b16 %v54
  %v103 = vunpack.c.l.b16 %v55
  %v104 = vunpack.c.l.b16 %v56
  %v105 = vunpack.c.l.b16 %v57
  %v106 = vunpack.c.l.b16 %v58
  %v107 = vunpack.c.l.b16 %v59
  %v108 = vunpack.c.l.b16 %v60
  %v109 = vunpack.c.l.b16 %v61
  %v110 = vunpack.c.l.b16 %v62
  %v111 = vunpack.c.l.b16 %v63
  %v112 = vpack.c.b16 %v97, %v96
  %v113 = vpack.c.b16 %v99, %v98
  %v114 = vpack.c.b16 %v101, %v100
  %v115 = vpack.c.b16 %v103, %v102
  %v116 = vpack.c.b16 %v105, %v104
  %v117 = vpack.c.b16 %v107, %v106
  %v118 = vpack.c.b16 %v109, %v108
  %v119 = vpack.c.b16 %v111, %v110
  %128 = vxpose.xlu0.c.b16.start [1/8] %v112, 128
  %129 = vxpose.xlu0.c.b16.cont [2/8] %v113, 128
  %130 = vxpose.xlu0.c.b16.cont [3/8] %v114, 128
  %131 = vxpose.xlu0.c.b16.cont [4/8] %v115, 128
  %132 = vxpose.xlu0.c.b16.cont [5/8] %v116, 128
  %133 = vxpose.xlu0.c.b16.cont [6/8] %v117, 128
  %134 = vxpose.xlu0.c.b16.cont [7/8] %v118, 128
  %135 = vxpose.xlu0.c.b16.end [8/8] %v119, 128
  %v136 = vpop.trf.xlu0
  %v137 = vpop.trf.xlu0
  %v138 = vpop.trf.xlu0
  %v139 = vpop.trf.xlu0
  %v140 = vpop.trf.xlu0
  %v141 = vpop.trf.xlu0
  %v142 = vpop.trf.xlu0
  %v143 = vpop.trf.xlu0
  %v160 = vunpack.c.l.b16 %v64
  %v161 = vunpack.c.l.b16 %v65
  %v162 = vunpack.c.l.b16 %v66
  %v163 = vunpack.c.l.b16 %v67
  %v164 = vunpack.c.l.b16 %v68
  %v165 = vunpack.c.l.b16 %v69
  %v166 = vunpack.c.l.b16 %v70
  %v167 = vunpack.c.l.b16 %v71
  %v168 = vunpack.c.l.b16 %v72
  %v169 = vunpack.c.l.b16 %v73
  %v170 = vunpack.c.l.b16 %v74
  %v171 = vunpack.c.l.b16 %v75
  %v172 = vunpack.c.l.b16 %v76
  %v173 = vunpack.c.l.b16 %v77
  %v174 = vunpack.c.l.b16 %v78
  %v175 = vunpack.c.l.b16 %v79
  %v176 = vpack.c.b16 %v161, %v160
  %v177 = vpack.c.b16 %v163, %v162
  %v178 = vpack.c.b16 %v165, %v164
  %v179 = vpack.c.b16 %v167, %v166
  %v180 = vpack.c.b16 %v169, %v168
  %v181 = vpack.c.b16 %v171, %v170
  %v182 = vpack.c.b16 %v173, %v172
  %v183 = vpack.c.b16 %v175, %v174
  %192 = vmatprep.subr.bf16.mxu0 0
  %193 = vmatpush1.bf16.msra.mxu0 %v176
  %194 = vmatprep.subr.bf16.mxu0 0
  %195 = vmatpush1.bf16.msra.mxu0 %v177
  %196 = vmatprep.subr.bf16.mxu0 0
  %197 = vmatpush1.bf16.msra.mxu0 %v178
  %198 = vmatprep.subr.bf16.mxu0 0
  %199 = vmatpush1.bf16.msra.mxu0 %v179
  %200 = vmatprep.subr.bf16.mxu0 0
  %201 = vmatpush1.bf16.msra.mxu0 %v180
  %202 = vmatprep.subr.bf16.mxu0 0
  %203 = vmatpush1.bf16.msra.mxu0 %v181
  %204 = vmatprep.subr.bf16.mxu0 0
  %205 = vmatpush1.bf16.msra.mxu0 %v182
  %206 = vmatprep.subr.bf16.mxu0 0
  %207 = vmatpush1.bf16.msra.mxu0 %v183
  %208 = vmatprep.subr.bf16.mxu0 0
  %209 = vmatpush1.bf16.msra.mxu0 0
  %210 = vmatprep.subr.bf16.mxu0 0
  %211 = vmatpush1.bf16.msra.mxu0 0
  %212 = vmatprep.subr.bf16.mxu0 0
  %213 = vmatpush1.bf16.msra.mxu0 0
  %214 = vmatprep.subr.bf16.mxu0 0
  %215 = vmatpush1.bf16.msra.mxu0 0
  %216 = vmatprep.subr.bf16.mxu0 0
  %217 = vmatpush1.bf16.msra.mxu0 0
  %218 = vmatprep.subr.bf16.mxu0 0
  %219 = vmatpush1.bf16.msra.mxu0 0
  %220 = vmatprep.subr.bf16.mxu0 0
  %221 = vmatpush1.bf16.msra.mxu0 0
  %222 = vmatprep.subr.bf16.mxu0 0
  %223 = vmatpush1.bf16.msra.mxu0 0
  %224 = vmatprep.mubr.bf16.mxu0 0
  %225 = vmatmul.mubr.bf16.gmra.mrb[0].mxu0 %v136
  %v226 = vpop.f32.mrb[0].mxu0
  %v227 = vadd.f32 0.0, %v226
  %v228 = vpop.f32.mrb[0].mxu0
  %v229 = vpop.f32.mrb[0].mxu0
  %v230 = vadd.f32 0.0, %v229
  %v231 = vpop.f32.mrb[0].mxu0
  %232 = vmatprep.mubr.bf16.mxu0 0
  %233 = vmatmul.mubr.bf16.gmra.mrb[0].mxu0 %v137
  %v234 = vpop.f32.mrb[0].mxu0
  %v235 = vadd.f32 0.0, %v234
  %v236 = vpop.f32.mrb[0].mxu0
  %v237 = vpop.f32.mrb[0].mxu0
  %v238 = vadd.f32 0.0, %v237
  %v239 = vpop.f32.mrb[0].mxu0
  %240 = vmatprep.mubr.bf16.mxu0 0
  %241 = vmatmul.mubr.bf16.gmra.mrb[0].mxu0 %v138
  %v242 = vpop.f32.mrb[0].mxu0
  %v243 = vadd.f32 0.0, %v242
  %v244 = vpop.f32.mrb[0].mxu0
  %v245 = vpop.f32.mrb[0].mxu0
  %v246 = vadd.f32 0.0, %v245
  %v247 = vpop.f32.mrb[0].mxu0
  %248 = vmatprep.mubr.bf16.mxu0 0
  %249 = vmatmul.mubr.bf16.gmra.mrb[0].mxu0 %v139
  %v250 = vpop.f32.mrb[0].mxu0
  %v251 = vadd.f32 0.0, %v250
  %v252 = vpop.f32.mrb[0].mxu0
  %v253 = vpop.f32.mrb[0].mxu0
  %v254 = vadd.f32 0.0, %v253
  %v255 = vpop.f32.mrb[0].mxu0
  %256 = vmatprep.mubr.bf16.mxu0 0
  %257 = vmatmul.mubr.bf16.gmra.mrb[0].mxu0 %v140
  %v258 = vpop.f32.mrb[0].mxu0
  %v259 = vadd.f32 0.0, %v258
  %v260 = vpop.f32.mrb[0].mxu0
  %v261 = vpop.f32.mrb[0].mxu0
  %v262 = vadd.f32 0.0, %v261
  %v263 = vpop.f32.mrb[0].mxu0
  %264 = vmatprep.mubr.bf16.mxu0 0
  %265 = vmatmul.mubr.bf16.gmra.mrb[0].mxu0 %v141
  %v266 = vpop.f32.mrb[0].mxu0
  %v267 = vadd.f32 0.0, %v266
  %v268 = vpop.f32.mrb[0].mxu0
  %v269 = vpop.f32.mrb[0].mxu0
  %v270 = vadd.f32 0.0, %v269
  %v271 = vpop.f32.mrb[0].mxu0
  %272 = vmatprep.mubr.bf16.mxu0 0
  %273 = vmatmul.mubr.bf16.gmra.mrb[0].mxu0 %v142
  %v274 = vpop.f32.mrb[0].mxu0
  %v275 = vadd.f32 0.0, %v274
  %v276 = vpop.f32.mrb[0].mxu0
  %v277 = vpop.f32.mrb[0].mxu0
  %v278 = vadd.f32 0.0, %v277
  %v279 = vpop.f32.mrb[0].mxu0
  %280 = vmatprep.mubr.bf16.mxu0 0
  %281 = vmatmul.mubr.bf16.gmra.mrb[0].mxu0 %v143
  %v282 = vpop.f32.mrb[0].mxu0
  %v283 = vadd.f32 0.0, %v282
  %v284 = vpop.f32.mrb[0].mxu0
  %v285 = vpop.f32.mrb[0].mxu0
  %v286 = vadd.f32 0.0, %v285
  %v287 = vpop.f32.mrb[0].mxu0
  %288 = vdwg.mxu0
  %v289 = vadd.f32 %v32, %v227
  %v290 = vadd.f32 %v33, %v230
  %v291 = vadd.f32 %v34, %v235
  %v292 = vadd.f32 %v35, %v238
  %v293 = vadd.f32 %v36, %v243
  %v294 = vadd.f32 %v37, %v246
  %v295 = vadd.f32 %v38, %v251
  %v296 = vadd.f32 %v39, %v254
  %v297 = vadd.f32 %v40, %v259
  %v298 = vadd.f32 %v41, %v262
  %v299 = vadd.f32 %v42, %v267
  %v300 = vadd.f32 %v43, %v270
  %v301 = vadd.f32 %v44, %v275
  %v302 = vadd.f32 %v45, %v278
  %v303 = vadd.f32 %v46, %v283
  %v304 = vadd.f32 %v47, %v286
  %305 = vst [vmem:[#allocation2] sm:$0xff] %v289
  %306 = vst [vmem:[#allocation2 + $0x8] sm:$0xff] %v290
  %307 = vst [vmem:[#allocation2 + $0x10] sm:$0xff] %v291
  %308 = vst [vmem:[#allocation2 + $0x18] sm:$0xff] %v292
  %309 = vst [vmem:[#allocation2 + $0x20] sm:$0xff] %v293
  %310 = vst [vmem:[#allocation2 + $0x28] sm:$0xff] %v294
  %311 = vst [vmem:[#allocation2 + $0x30] sm:$0xff] %v295
  %312 = vst [vmem:[#allocation2 + $0x38] sm:$0xff] %v296
  %313 = vst [vmem:[#allocation2 + $0x40] sm:$0xff] %v297
  %314 = vst [vmem:[#allocation2 + $0x48] sm:$0xff] %v298
  %315 = vst [vmem:[#allocation2 + $0x50] sm:$0xff] %v299
  %316 = vst [vmem:[#allocation2 + $0x58] sm:$0xff] %v300
  %317 = vst [vmem:[#allocation2 + $0x60] sm:$0xff] %v301
  %318 = vst [vmem:[#allocation2 + $0x68] sm:$0xff] %v302
  %319 = vst [vmem:[#allocation2 + $0x70] sm:$0xff] %v303
  %320 = vst [vmem:[#allocation2 + $0x78] sm:$0xff] %v304
  // Predicated region
  $region14: #{unignn_forward.4} parent=0 // pred_check
    %p321 = pneg %p12
  $region15: #{unignn_forward.4} parent=0 // pred_check_branch
    %323 = sbr.rel (%p321) target = $region17
  $region16: #{unignn_forward.4} parent=0 // pred_region
    %v324 = vld [vmem:[#allocation2] sm:$0xff]
    %v325 = vld [vmem:[#allocation2 + $0x8] sm:$0xff]
    %v326 = vld [vmem:[#allocation2 + $0x10] sm:$0xff]
    %v327 = vld [vmem:[#allocation2 + $0x18] sm:$0xff]
    %v328 = vld [vmem:[#allocation2 + $0x20] sm:$0xff]
    %v329 = vld [vmem:[#allocation2 + $0x28] sm:$0xff]
    %v330 = vld [vmem:[#allocation2 + $0x30] sm:$0xff]
    %v331 = vld [vmem:[#allocation2 + $0x38] sm:$0xff]
    %v332 = vld [vmem:[#allocation2 + $0x40] sm:$0xff]
    %v333 = vld [vmem:[#allocation2 + $0x48] sm:$0xff]
    %v334 = vld [vmem:[#allocation2 + $0x50] sm:$0xff]
    %v335 = vld [vmem:[#allocation2 + $0x58] sm:$0xff]
    %v336 = vld [vmem:[#allocation2 + $0x60] sm:$0xff]
    %v337 = vld [vmem:[#allocation2 + $0x68] sm:$0xff]
    %v338 = vld [vmem:[#allocation2 + $0x70] sm:$0xff]
    %v339 = vld [vmem:[#allocation2 + $0x78] sm:$0xff]
    %v340 = vpack.c.bf16 %v325, %v324
    %v341 = vpack.c.bf16 %v327, %v326
    %v342 = vpack.c.bf16 %v329, %v328
    %v343 = vpack.c.bf16 %v331, %v330
    %v344 = vpack.c.bf16 %v333, %v332
    %v345 = vpack.c.bf16 %v335, %v334
    %v346 = vpack.c.bf16 %v337, %v336
    %v347 = vpack.c.bf16 %v339, %v338
    %v356 = vunpack.c.l.b16 %v340
    %v357 = vunpack.c.h.b16 %v340
    %v358 = vunpack.c.l.b16 %v341
    %v359 = vunpack.c.h.b16 %v341
    %v360 = vunpack.c.l.b16 %v342
    %v361 = vunpack.c.h.b16 %v342
    %v362 = vunpack.c.l.b16 %v343
    %v363 = vunpack.c.h.b16 %v343
    %v364 = vunpack.c.l.b16 %v344
    %v365 = vunpack.c.h.b16 %v344
    %v366 = vunpack.c.l.b16 %v345
    %v367 = vunpack.c.h.b16 %v345
    %v368 = vunpack.c.l.b16 %v346
    %v369 = vunpack.c.h.b16 %v346
    %v370 = vunpack.c.l.b16 %v347
    %v371 = vunpack.c.h.b16 %v347
    %v372 = vpack.c.b16 %v356, %v356
    %v373 = vpack.c.b16 %v357, %v357
    %v374 = vpack.c.b16 %v358, %v358
    %v375 = vpack.c.b16 %v359, %v359
    %v376 = vpack.c.b16 %v360, %v360
    %v377 = vpack.c.b16 %v361, %v361
    %v378 = vpack.c.b16 %v362, %v362
    %v379 = vpack.c.b16 %v363, %v363
    %v380 = vpack.c.b16 %v364, %v364
    %v381 = vpack.c.b16 %v365, %v365
    %v382 = vpack.c.b16 %v366, %v366
    %v383 = vpack.c.b16 %v367, %v367
    %v384 = vpack.c.b16 %v368, %v368
    %v385 = vpack.c.b16 %v369, %v369
    %v386 = vpack.c.b16 %v370, %v370
    %v387 = vpack.c.b16 %v371, %v371
    %404 = vst [vmem:[%s2] sm:$0xf] %v372
    %405 = vst [vmem:[%s2 + $0x4] sm:$0xf] %v373
    %406 = vst [vmem:[%s2 + $0x8] sm:$0xf] %v374
    %407 = vst [vmem:[%s2 + $0xc] sm:$0xf] %v375
    %408 = vst [vmem:[%s2 + $0x10] sm:$0xf] %v376
    %409 = vst [vmem:[%s2 + $0x14] sm:$0xf] %v377
    %410 = vst [vmem:[%s2 + $0x18] sm:$0xf] %v378
    %411 = vst [vmem:[%s2 + $0x1c] sm:$0xf] %v379
    %412 = vst [vmem:[%s2 + $0x20] sm:$0xf] %v380
    %413 = vst [vmem:[%s2 + $0x24] sm:$0xf] %v381
    %414 = vst [vmem:[%s2 + $0x28] sm:$0xf] %v382
    %415 = vst [vmem:[%s2 + $0x2c] sm:$0xf] %v383
    %416 = vst [vmem:[%s2 + $0x30] sm:$0xf] %v384
    %417 = vst [vmem:[%s2 + $0x34] sm:$0xf] %v385
    %418 = vst [vmem:[%s2 + $0x38] sm:$0xf] %v386
    %419 = vst [vmem:[%s2 + $0x3c] sm:$0xf] %v387
  $region17: #{unignn_forward.4} parent=0 // pred_fallthru
    _
  // Predicated region
  $region18: #{unignn_forward.4} parent=0 // pred_check
    _
  $region19: #{unignn_forward.4} parent=0 // pred_check_branch
    %421 = sbr.rel (0) target = $region21
  $region20: #{unignn_forward.4} parent=0 // pred_region
    _
  $region21: #{unignn_forward.4} parent=0 // pred_fallthru
    _
  // Predicated region
  $region22: #{unignn_forward.4} parent=0 // pred_check
    _
  $region23: #{unignn_forward.4} parent=0 // pred_check_branch
    %423 = sbr.rel (0) target = $region25
  $region24: #{unignn_forward.4} parent=0 // pred_region
    _
  $region25: #{unignn_forward.4} parent=0 // pred_fallthru
    _

// kernel: unignn_forward.5
$region0: #{unignn_forward.5}
  #allocation0 [shape = 'u32[]', space=smem, size = 0x4, offset = 0x4, fixed_abs, tag = 'smem constant byte address 0x4 - core index']
  #allocation1 [shape = 'u32[144,128]{1,0:T(1,128)}', space=vmem, size = 0x12000, scoped, tag = 'internal scratch']
  #allocation2 [shape = 'f32[128,128]{1,0:T(8,128)}', space=vmem, size = 0x10000, scoped, tag = 'scratch operand']
  %s0 = inlined_call_operand.vmem [shape: bf16[128,128], index: 0, kind: input, shape index: {}]
  %s1 = inlined_call_operand.vmem [shape: bf16[128,128], index: 1, kind: input, shape index: {}]
  %s2 = inlined_call_operand.vmem [shape: f32[128,1], index: 2, kind: input, shape index: {}]
  %s3 = inlined_call_operand.vmem [shape: bf16[128,128], index: 3, kind: input, shape index: {}]
  %s4 = inlined_call_operand.vmem [shape: f32[1,128], index: 4, kind: input, shape index: {}]
  %s5 = inlined_call_operand.vmem [shape: bf16[128,128], index: 5, kind: output, shape index: {}]
  %s6 = sld [smem:[#allocation0]]
  $region38: #{unignn_forward.5} parent=0
    _
  %s8 = ssub.s32 1, %s6
  %s9 = scalar_select 0, %s8, %s6
  // Predicated region
  $region2: #{unignn_forward.5} parent=0 // pred_check
    _
  $region3: #{unignn_forward.5} parent=0 // pred_check_branch
    %11 = sbr.rel (0) target = $region5
  $region4: #{unignn_forward.5} parent=0 // pred_region
    _
  $region5: #{unignn_forward.5} parent=0 // pred_fallthru
    _
  // Predicated region
  $region6: #{unignn_forward.5} parent=0 // pred_check
    _
  $region7: #{unignn_forward.5} parent=0 // pred_check_branch
    %13 = sbr.rel (0) target = $region9
  $region8: #{unignn_forward.5} parent=0 // pred_region
    _
  $region9: #{unignn_forward.5} parent=0 // pred_fallthru
    _
  // Predicated region
  $region10: #{unignn_forward.5} parent=0 // pred_check
    _
  $region11: #{unignn_forward.5} parent=0 // pred_check_branch
    %15 = sbr.rel (0) target = $region13
  $region12: #{unignn_forward.5} parent=0 // pred_region
    _
  $region13: #{unignn_forward.5} parent=0 // pred_fallthru
    _
  // Predicated region
  $region14: #{unignn_forward.5} parent=0 // pred_check
    _
  $region15: #{unignn_forward.5} parent=0 // pred_check_branch
    %17 = sbr.rel (0) target = $region17
  $region16: #{unignn_forward.5} parent=0 // pred_region
    _
  $region17: #{unignn_forward.5} parent=0 // pred_fallthru
    _
  // Predicated region
  $region18: #{unignn_forward.5} parent=0 // pred_check
    _
  $region19: #{unignn_forward.5} parent=0 // pred_check_branch
    %19 = sbr.rel (0) target = $region21
  $region20: #{unignn_forward.5} parent=0 // pred_region
    _
  $region21: #{unignn_forward.5} parent=0 // pred_fallthru
    _
  %p21 = scmp.eq.s32.totalorder 0, 0
  // Predicated region
  $region22: #{unignn_forward.5} parent=0 // pred_check
    %p22 = pneg %p21
  $region23: #{unignn_forward.5} parent=0 // pred_check_branch
    %24 = sbr.rel (%p22) target = $region25
  $region24: #{unignn_forward.5} parent=0 // pred_region
    %25 = vst [vmem:[#allocation2] sm:$0xff] 0.0
    %26 = vst [vmem:[#allocation2 + $0x8] sm:$0xff] 0.0
    %27 = vst [vmem:[#allocation2 + $0x10] sm:$0xff] 0.0
    %28 = vst [vmem:[#allocation2 + $0x18] sm:$0xff] 0.0
    %29 = vst [vmem:[#allocation2 + $0x20] sm:$0xff] 0.0
    %30 = vst [vmem:[#allocation2 + $0x28] sm:$0xff] 0.0
    %31 = vst [vmem:[#allocation2 + $0x30] sm:$0xff] 0.0
    %32 = vst [vmem:[#allocation2 + $0x38] sm:$0xff] 0.0
    %33 = vst [vmem:[#allocation2 + $0x40] sm:$0xff] 0.0
    %34 = vst [vmem:[#allocation2 + $0x48] sm:$0xff] 0.0
    %35 = vst [vmem:[#allocation2 + $0x50] sm:$0xff] 0.0
    %36 = vst [vmem:[#allocation2 + $0x58] sm:$0xff] 0.0
    %37 = vst [vmem:[#allocation2 + $0x60] sm:$0xff] 0.0
    %38 = vst [vmem:[#allocation2 + $0x68] sm:$0xff] 0.0
    %39 = vst [vmem:[#allocation2 + $0x70] sm:$0xff] 0.0
    %40 = vst [vmem:[#allocation2 + $0x78] sm:$0xff] 0.0
  $region25: #{unignn_forward.5} parent=0 // pred_fallthru
    _
  %v41 = vld [vmem:[#allocation2] sm:$0xff]
  %v42 = vld [vmem:[#allocation2 + $0x8] sm:$0xff]
  %v43 = vld [vmem:[#allocation2 + $0x10] sm:$0xff]
  %v44 = vld [vmem:[#allocation2 + $0x18] sm:$0xff]
  %v45 = vld [vmem:[#allocation2 + $0x20] sm:$0xff]
  %v46 = vld [vmem:[#allocation2 + $0x28] sm:$0xff]
  %v47 = vld [vmem:[#allocation2 + $0x30] sm:$0xff]
  %v48 = vld [vmem:[#allocation2 + $0x38] sm:$0xff]
  %v49 = vld [vmem:[#allocation2 + $0x40] sm:$0xff]
  %v50 = vld [vmem:[#allocation2 + $0x48] sm:$0xff]
  %v51 = vld [vmem:[#allocation2 + $0x50] sm:$0xff]
  %v52 = vld [vmem:[#allocation2 + $0x58] sm:$0xff]
  %v53 = vld [vmem:[#allocation2 + $0x60] sm:$0xff]
  %v54 = vld [vmem:[#allocation2 + $0x68] sm:$0xff]
  %v55 = vld [vmem:[#allocation2 + $0x70] sm:$0xff]
  %v56 = vld [vmem:[#allocation2 + $0x78] sm:$0xff]
  %v57 = vld [vmem:[%s0] sm:$0xf]
  %v58 = vld [vmem:[%s0 + $0x4] sm:$0xf]
  %v59 = vld [vmem:[%s0 + $0x8] sm:$0xf]
  %v60 = vld [vmem:[%s0 + $0xc] sm:$0xf]
  %v61 = vld [vmem:[%s0 + $0x10] sm:$0xf]
  %v62 = vld [vmem:[%s0 + $0x14] sm:$0xf]
  %v63 = vld [vmem:[%s0 + $0x18] sm:$0xf]
  %v64 = vld [vmem:[%s0 + $0x1c] sm:$0xf]
  %v65 = vld [vmem:[%s0 + $0x20] sm:$0xf]
  %v66 = vld [vmem:[%s0 + $0x24] sm:$0xf]
  %v67 = vld [vmem:[%s0 + $0x28] sm:$0xf]
  %v68 = vld [vmem:[%s0 + $0x2c] sm:$0xf]
  %v69 = vld [vmem:[%s0 + $0x30] sm:$0xf]
  %v70 = vld [vmem:[%s0 + $0x34] sm:$0xf]
  %v71 = vld [vmem:[%s0 + $0x38] sm:$0xf]
  %v72 = vld [vmem:[%s0 + $0x3c] sm:$0xf]
  %v73 = vld [vmem:[%s1] sm:$0xf]
  %v74 = vld [vmem:[%s1 + $0x4] sm:$0xf]
  %v75 = vld [vmem:[%s1 + $0x8] sm:$0xf]
  %v76 = vld [vmem:[%s1 + $0xc] sm:$0xf]
  %v77 = vld [vmem:[%s1 + $0x10] sm:$0xf]
  %v78 = vld [vmem:[%s1 + $0x14] sm:$0xf]
  %v79 = vld [vmem:[%s1 + $0x18] sm:$0xf]
  %v80 = vld [vmem:[%s1 + $0x1c] sm:$0xf]
  %v81 = vld [vmem:[%s1 + $0x20] sm:$0xf]
  %v82 = vld [vmem:[%s1 + $0x24] sm:$0xf]
  %v83 = vld [vmem:[%s1 + $0x28] sm:$0xf]
  %v84 = vld [vmem:[%s1 + $0x2c] sm:$0xf]
  %v85 = vld [vmem:[%s1 + $0x30] sm:$0xf]
  %v86 = vld [vmem:[%s1 + $0x34] sm:$0xf]
  %v87 = vld [vmem:[%s1 + $0x38] sm:$0xf]
  %v88 = vld [vmem:[%s1 + $0x3c] sm:$0xf]
  %v105 = vunpack.c.l.b16 %v57
  %v106 = vunpack.c.l.b16 %v58
  %v107 = vunpack.c.l.b16 %v59
  %v108 = vunpack.c.l.b16 %v60
  %v109 = vunpack.c.l.b16 %v61
  %v110 = vunpack.c.l.b16 %v62
  %v111 = vunpack.c.l.b16 %v63
  %v112 = vunpack.c.l.b16 %v64
  %v113 = vunpack.c.l.b16 %v65
  %v114 = vunpack.c.l.b16 %v66
  %v115 = vunpack.c.l.b16 %v67
  %v116 = vunpack.c.l.b16 %v68
  %v117 = vunpack.c.l.b16 %v69
  %v118 = vunpack.c.l.b16 %v70
  %v119 = vunpack.c.l.b16 %v71
  %v120 = vunpack.c.l.b16 %v72
  %v121 = vpack.c.b16 %v106, %v105
  %v122 = vpack.c.b16 %v108, %v107
  %v123 = vpack.c.b16 %v110, %v109
  %v124 = vpack.c.b16 %v112, %v111
  %v125 = vpack.c.b16 %v114, %v113
  %v126 = vpack.c.b16 %v116, %v115
  %v127 = vpack.c.b16 %v118, %v117
  %v128 = vpack.c.b16 %v120, %v119
  %v153 = vunpack.c.l.b16 %v73
  %v154 = vunpack.c.l.b16 %v74
  %v155 = vunpack.c.l.b16 %v75
  %v156 = vunpack.c.l.b16 %v76
  %v157 = vunpack.c.l.b16 %v77
  %v158 = vunpack.c.l.b16 %v78
  %v159 = vunpack.c.l.b16 %v79
  %v160 = vunpack.c.l.b16 %v80
  %v161 = vunpack.c.l.b16 %v81
  %v162 = vunpack.c.l.b16 %v82
  %v163 = vunpack.c.l.b16 %v83
  %v164 = vunpack.c.l.b16 %v84
  %v165 = vunpack.c.l.b16 %v85
  %v166 = vunpack.c.l.b16 %v86
  %v167 = vunpack.c.l.b16 %v87
  %v168 = vunpack.c.l.b16 %v88
  %v169 = vpack.c.b16 %v154, %v153
  %v170 = vpack.c.b16 %v156, %v155
  %v171 = vpack.c.b16 %v158, %v157
  %v172 = vpack.c.b16 %v160, %v159
  %v173 = vpack.c.b16 %v162, %v161
  %v174 = vpack.c.b16 %v164, %v163
  %v175 = vpack.c.b16 %v166, %v165
  %v176 = vpack.c.b16 %v168, %v167
  %185 = vmatprep.subr.bf16.mxu0 0
  %186 = vmatpush1.bf16.msra.mxu0 %v169
  %187 = vmatprep.subr.bf16.mxu0 0
  %188 = vmatpush1.bf16.msra.mxu0 %v170
  %189 = vmatprep.subr.bf16.mxu0 0
  %190 = vmatpush1.bf16.msra.mxu0 %v171
  %191 = vmatprep.subr.bf16.mxu0 0
  %192 = vmatpush1.bf16.msra.mxu0 %v172
  %193 = vmatprep.subr.bf16.mxu0 0
  %194 = vmatpush1.bf16.msra.mxu0 %v173
  %195 = vmatprep.subr.bf16.mxu0 0
  %196 = vmatpush1.bf16.msra.mxu0 %v174
  %197 = vmatprep.subr.bf16.mxu0 0
  %198 = vmatpush1.bf16.msra.mxu0 %v175
  %199 = vmatprep.subr.bf16.mxu0 0
  %200 = vmatpush1.bf16.msra.mxu0 %v176
  %201 = vmatprep.subr.bf16.mxu0 0
  %202 = vmatpush1.bf16.msra.mxu0 0
  %203 = vmatprep.subr.bf16.mxu0 0
  %204 = vmatpush1.bf16.msra.mxu0 0
  %205 = vmatprep.subr.bf16.mxu0 0
  %206 = vmatpush1.bf16.msra.mxu0 0
  %207 = vmatprep.subr.bf16.mxu0 0
  %208 = vmatpush1.bf16.msra.mxu0 0
  %209 = vmatprep.subr.bf16.mxu0 0
  %210 = vmatpush1.bf16.msra.mxu0 0
  %211 = vmatprep.subr.bf16.mxu0 0
  %212 = vmatpush1.bf16.msra.mxu0 0
  %213 = vmatprep.subr.bf16.mxu0 0
  %214 = vmatpush1.bf16.msra.mxu0 0
  %215 = vmatprep.subr.bf16.mxu0 0
  %216 = vmatpush1.bf16.msra.mxu0 0
  %217 = vmatprep.mubr.bf16.mxu0 0
  %218 = vmatmul.mubr.bf16.gmra.mrb[0].mxu0 %v121
  %v219 = vpop.f32.mrb[0].mxu0
  %v220 = vadd.f32 0.0, %v219
  %v221 = vpop.f32.mrb[0].mxu0
  %v222 = vpop.f32.mrb[0].mxu0
  %v223 = vadd.f32 0.0, %v222
  %v224 = vpop.f32.mrb[0].mxu0
  %225 = vmatprep.mubr.bf16.mxu0 0
  %226 = vmatmul.mubr.bf16.gmra.mrb[0].mxu0 %v122
  %v227 = vpop.f32.mrb[0].mxu0
  %v228 = vadd.f32 0.0, %v227
  %v229 = vpop.f32.mrb[0].mxu0
  %v230 = vpop.f32.mrb[0].mxu0
  %v231 = vadd.f32 0.0, %v230
  %v232 = vpop.f32.mrb[0].mxu0
  %233 = vmatprep.mubr.bf16.mxu0 0
  %234 = vmatmul.mubr.bf16.gmra.mrb[0].mxu0 %v123
  %v235 = vpop.f32.mrb[0].mxu0
  %v236 = vadd.f32 0.0, %v235
  %v237 = vpop.f32.mrb[0].mxu0
  %v238 = vpop.f32.mrb[0].mxu0
  %v239 = vadd.f32 0.0, %v238
  %v240 = vpop.f32.mrb[0].mxu0
  %241 = vmatprep.mubr.bf16.mxu0 0
  %242 = vmatmul.mubr.bf16.gmra.mrb[0].mxu0 %v124
  %v243 = vpop.f32.mrb[0].mxu0
  %v244 = vadd.f32 0.0, %v243
  %v245 = vpop.f32.mrb[0].mxu0
  %v246 = vpop.f32.mrb[0].mxu0
  %v247 = vadd.f32 0.0, %v246
  %v248 = vpop.f32.mrb[0].mxu0
  %249 = vmatprep.mubr.bf16.mxu0 0
  %250 = vmatmul.mubr.bf16.gmra.mrb[0].mxu0 %v125
  %v251 = vpop.f32.mrb[0].mxu0
  %v252 = vadd.f32 0.0, %v251
  %v253 = vpop.f32.mrb[0].mxu0
  %v254 = vpop.f32.mrb[0].mxu0
  %v255 = vadd.f32 0.0, %v254
  %v256 = vpop.f32.mrb[0].mxu0
  %257 = vmatprep.mubr.bf16.mxu0 0
  %258 = vmatmul.mubr.bf16.gmra.mrb[0].mxu0 %v126
  %v259 = vpop.f32.mrb[0].mxu0
  %v260 = vadd.f32 0.0, %v259
  %v261 = vpop.f32.mrb[0].mxu0
  %v262 = vpop.f32.mrb[0].mxu0
  %v263 = vadd.f32 0.0, %v262
  %v264 = vpop.f32.mrb[0].mxu0
  %265 = vmatprep.mubr.bf16.mxu0 0
  %266 = vmatmul.mubr.bf16.gmra.mrb[0].mxu0 %v127
  %v267 = vpop.f32.mrb[0].mxu0
  %v268 = vadd.f32 0.0, %v267
  %v269 = vpop.f32.mrb[0].mxu0
  %v270 = vpop.f32.mrb[0].mxu0
  %v271 = vadd.f32 0.0, %v270
  %v272 = vpop.f32.mrb[0].mxu0
  %273 = vmatprep.mubr.bf16.mxu0 0
  %274 = vmatmul.mubr.bf16.gmra.mrb[0].mxu0 %v128
  %v275 = vpop.f32.mrb[0].mxu0
  %v276 = vadd.f32 0.0, %v275
  %v277 = vpop.f32.mrb[0].mxu0
  %v278 = vpop.f32.mrb[0].mxu0
  %v279 = vadd.f32 0.0, %v278
  %v280 = vpop.f32.mrb[0].mxu0
  %281 = vdwg.mxu0
  %v282 = vadd.f32 %v41, %v220
  %v283 = vadd.f32 %v42, %v223
  %v284 = vadd.f32 %v43, %v228
  %v285 = vadd.f32 %v44, %v231
  %v286 = vadd.f32 %v45, %v236
  %v287 = vadd.f32 %v46, %v239
  %v288 = vadd.f32 %v47, %v244
  %v289 = vadd.f32 %v48, %v247
  %v290 = vadd.f32 %v49, %v252
  %v291 = vadd.f32 %v50, %v255
  %v292 = vadd.f32 %v51, %v260
  %v293 = vadd.f32 %v52, %v263
  %v294 = vadd.f32 %v53, %v268
  %v295 = vadd.f32 %v54, %v271
  %v296 = vadd.f32 %v55, %v276
  %v297 = vadd.f32 %v56, %v279
  %298 = vst [vmem:[#allocation2] sm:$0xff] %v282
  %299 = vst [vmem:[#allocation2 + $0x8] sm:$0xff] %v283
  %300 = vst [vmem:[#allocation2 + $0x10] sm:$0xff] %v284
  %301 = vst [vmem:[#allocation2 + $0x18] sm:$0xff] %v285
  %302 = vst [vmem:[#allocation2 + $0x20] sm:$0xff] %v286
  %303 = vst [vmem:[#allocation2 + $0x28] sm:$0xff] %v287
  %304 = vst [vmem:[#allocation2 + $0x30] sm:$0xff] %v288
  %305 = vst [vmem:[#allocation2 + $0x38] sm:$0xff] %v289
  %306 = vst [vmem:[#allocation2 + $0x40] sm:$0xff] %v290
  %307 = vst [vmem:[#allocation2 + $0x48] sm:$0xff] %v291
  %308 = vst [vmem:[#allocation2 + $0x50] sm:$0xff] %v292
  %309 = vst [vmem:[#allocation2 + $0x58] sm:$0xff] %v293
  %310 = vst [vmem:[#allocation2 + $0x60] sm:$0xff] %v294
  %311 = vst [vmem:[#allocation2 + $0x68] sm:$0xff] %v295
  %312 = vst [vmem:[#allocation2 + $0x70] sm:$0xff] %v296
  %313 = vst [vmem:[#allocation2 + $0x78] sm:$0xff] %v297
  // Predicated region
  $region26: #{unignn_forward.5} parent=0 // pred_check
    %p314 = pneg %p21
  $region27: #{unignn_forward.5} parent=0 // pred_check_branch
    %316 = sbr.rel (%p314) target = $region29
  $region28: #{unignn_forward.5} parent=0 // pred_region
    %v317 = vld [vmem:[#allocation2] sm:$0xff]
    %v318 = vld [vmem:[#allocation2 + $0x8] sm:$0xff]
    %v319 = vld [vmem:[#allocation2 + $0x10] sm:$0xff]
    %v320 = vld [vmem:[#allocation2 + $0x18] sm:$0xff]
    %v321 = vld [vmem:[#allocation2 + $0x20] sm:$0xff]
    %v322 = vld [vmem:[#allocation2 + $0x28] sm:$0xff]
    %v323 = vld [vmem:[#allocation2 + $0x30] sm:$0xff]
    %v324 = vld [vmem:[#allocation2 + $0x38] sm:$0xff]
    %v325 = vld [vmem:[#allocation2 + $0x40] sm:$0xff]
    %v326 = vld [vmem:[#allocation2 + $0x48] sm:$0xff]
    %v327 = vld [vmem:[#allocation2 + $0x50] sm:$0xff]
    %v328 = vld [vmem:[#allocation2 + $0x58] sm:$0xff]
    %v329 = vld [vmem:[#allocation2 + $0x60] sm:$0xff]
    %v330 = vld [vmem:[#allocation2 + $0x68] sm:$0xff]
    %v331 = vld [vmem:[#allocation2 + $0x70] sm:$0xff]
    %v332 = vld [vmem:[#allocation2 + $0x78] sm:$0xff]
    %v333 = vld [vmem:[%s2] sm:$0xff]
    %v334 = vld [vmem:[%s2 + $0x8] sm:$0xff]
    %v335 = vld [vmem:[%s2 + $0x10] sm:$0xff]
    %v336 = vld [vmem:[%s2 + $0x18] sm:$0xff]
    %v337 = vld [vmem:[%s2 + $0x20] sm:$0xff]
    %v338 = vld [vmem:[%s2 + $0x28] sm:$0xff]
    %v339 = vld [vmem:[%s2 + $0x30] sm:$0xff]
    %v340 = vld [vmem:[%s2 + $0x38] sm:$0xff]
    %v341 = vld [vmem:[%s2 + $0x40] sm:$0xff]
    %v342 = vld [vmem:[%s2 + $0x48] sm:$0xff]
    %v343 = vld [vmem:[%s2 + $0x50] sm:$0xff]
    %v344 = vld [vmem:[%s2 + $0x58] sm:$0xff]
    %v345 = vld [vmem:[%s2 + $0x60] sm:$0xff]
    %v346 = vld [vmem:[%s2 + $0x68] sm:$0xff]
    %v347 = vld [vmem:[%s2 + $0x70] sm:$0xff]
    %v348 = vld [vmem:[%s2 + $0x78] sm:$0xff]
    %350 = vset.pattern.permute.xlu0 0
    %351 = vperm.xlu0 %350, %v333
    %v352 = vpop.permute.xlu0 %351
    %355 = vset.pattern.permute.xlu0 0
    %356 = vperm.xlu0 %355, %v334
    %v357 = vpop.permute.xlu0 %356
    %360 = vset.pattern.permute.xlu0 0
    %361 = vperm.xlu0 %360, %v335
    %v362 = vpop.permute.xlu0 %361
    %365 = vset.pattern.permute.xlu0 0
    %366 = vperm.xlu0 %365, %v336
    %v367 = vpop.permute.xlu0 %366
    %370 = vset.pattern.permute.xlu0 0
    %371 = vperm.xlu0 %370, %v337
    %v372 = vpop.permute.xlu0 %371
    %375 = vset.pattern.permute.xlu0 0
    %376 = vperm.xlu0 %375, %v338
    %v377 = vpop.permute.xlu0 %376
    %380 = vset.pattern.permute.xlu0 0
    %381 = vperm.xlu0 %380, %v339
    %v382 = vpop.permute.xlu0 %381
    %385 = vset.pattern.permute.xlu0 0
    %386 = vperm.xlu0 %385, %v340
    %v387 = vpop.permute.xlu0 %386
    %390 = vset.pattern.permute.xlu0 0
    %391 = vperm.xlu0 %390, %v341
    %v392 = vpop.permute.xlu0 %391
    %395 = vset.pattern.permute.xlu0 0
    %396 = vperm.xlu0 %395, %v342
    %v397 = vpop.permute.xlu0 %396
    %400 = vset.pattern.permute.xlu0 0
    %401 = vperm.xlu0 %400, %v343
    %v402 = vpop.permute.xlu0 %401
    %405 = vset.pattern.permute.xlu0 0
    %406 = vperm.xlu0 %405, %v344
    %v407 = vpop.permute.xlu0 %406
    %410 = vset.pattern.permute.xlu0 0
    %411 = vperm.xlu0 %410, %v345
    %v412 = vpop.permute.xlu0 %411
    %415 = vset.pattern.permute.xlu0 0
    %416 = vperm.xlu0 %415, %v346
    %v417 = vpop.permute.xlu0 %416
    %420 = vset.pattern.permute.xlu0 0
    %421 = vperm.xlu0 %420, %v347
    %v422 = vpop.permute.xlu0 %421
    %425 = vset.pattern.permute.xlu0 0
    %426 = vperm.xlu0 %425, %v348
    %v427 = vpop.permute.xlu0 %426
    %v429 = vmul.f32 %v317, %v352
    %v430 = vmul.f32 %v318, %v357
    %v431 = vmul.f32 %v319, %v362
    %v432 = vmul.f32 %v320, %v367
    %v433 = vmul.f32 %v321, %v372
    %v434 = vmul.f32 %v322, %v377
    %v435 = vmul.f32 %v323, %v382
    %v436 = vmul.f32 %v324, %v387
    %v437 = vmul.f32 %v325, %v392
    %v438 = vmul.f32 %v326, %v397
    %v439 = vmul.f32 %v327, %v402
    %v440 = vmul.f32 %v328, %v407
    %v441 = vmul.f32 %v329, %v412
    %v442 = vmul.f32 %v330, %v417
    %v443 = vmul.f32 %v331, %v422
    %v444 = vmul.f32 %v332, %v427
    %v445 = vmul.f32 %v429, %v429
    %v446 = vmul.f32 %v430, %v430
    %v447 = vmul.f32 %v431, %v431
    %v448 = vmul.f32 %v432, %v432
    %v449 = vmul.f32 %v433, %v433
    %v450 = vmul.f32 %v434, %v434
    %v451 = vmul.f32 %v435, %v435
    %v452 = vmul.f32 %v436, %v436
    %v453 = vmul.f32 %v437, %v437
    %v454 = vmul.f32 %v438, %v438
    %v455 = vmul.f32 %v439, %v439
    %v456 = vmul.f32 %v440, %v440
    %v457 = vmul.f32 %v441, %v441
    %v458 = vmul.f32 %v442, %v442
    %v459 = vmul.f32 %v443, %v443
    %v460 = vmul.f32 %v444, %v444
    %461 = vadd.xlane.f32.xlu0 %v445
    %v462 = vpop.xlane.xlu0 %461
    %463 = vadd.xlane.f32.xlu0 %v446
    %v464 = vpop.xlane.xlu0 %463
    %465 = vadd.xlane.f32.xlu0 %v447
    %v466 = vpop.xlane.xlu0 %465
    %467 = vadd.xlane.f32.xlu0 %v448
    %v468 = vpop.xlane.xlu0 %467
    %469 = vadd.xlane.f32.xlu0 %v449
    %v470 = vpop.xlane.xlu0 %469
    %471 = vadd.xlane.f32.xlu0 %v450
    %v472 = vpop.xlane.xlu0 %471
    %473 = vadd.xlane.f32.xlu0 %v451
    %v474 = vpop.xlane.xlu0 %473
    %475 = vadd.xlane.f32.xlu0 %v452
    %v476 = vpop.xlane.xlu0 %475
    %477 = vadd.xlane.f32.xlu0 %v453
    %v478 = vpop.xlane.xlu0 %477
    %479 = vadd.xlane.f32.xlu0 %v454
    %v480 = vpop.xlane.xlu0 %479
    %481 = vadd.xlane.f32.xlu0 %v455
    %v482 = vpop.xlane.xlu0 %481
    %483 = vadd.xlane.f32.xlu0 %v456
    %v484 = vpop.xlane.xlu0 %483
    %485 = vadd.xlane.f32.xlu0 %v457
    %v486 = vpop.xlane.xlu0 %485
    %487 = vadd.xlane.f32.xlu0 %v458
    %v488 = vpop.xlane.xlu0 %487
    %489 = vadd.xlane.f32.xlu0 %v459
    %v490 = vpop.xlane.xlu0 %489
    %491 = vadd.xlane.f32.xlu0 %v460
    %v492 = vpop.xlane.xlu0 %491
    %vm493 = vcmp.gt.f32.partialorder %v462, 0.0
    %vm494 = vcmp.gt.f32.partialorder %v464, 0.0
    %vm495 = vcmp.gt.f32.partialorder %v466, 0.0
    %vm496 = vcmp.gt.f32.partialorder %v468, 0.0
    %vm497 = vcmp.gt.f32.partialorder %v470, 0.0
    %vm498 = vcmp.gt.f32.partialorder %v472, 0.0
    %vm499 = vcmp.gt.f32.partialorder %v474, 0.0
    %vm500 = vcmp.gt.f32.partialorder %v476, 0.0
    %vm501 = vcmp.gt.f32.partialorder %v478, 0.0
    %vm502 = vcmp.gt.f32.partialorder %v480, 0.0
    %vm503 = vcmp.gt.f32.partialorder %v482, 0.0
    %vm504 = vcmp.gt.f32.partialorder %v484, 0.0
    %vm505 = vcmp.gt.f32.partialorder %v486, 0.0
    %vm506 = vcmp.gt.f32.partialorder %v488, 0.0
    %vm507 = vcmp.gt.f32.partialorder %v490, 0.0
    %vm508 = vcmp.gt.f32.partialorder %v492, 0.0
    %v509 = vrsqrt.pop %v462
    %v510 = vrsqrt.pop %v464
    %v511 = vrsqrt.pop %v466
    %v512 = vrsqrt.pop %v468
    %v513 = vrsqrt.pop %v470
    %v514 = vrsqrt.pop %v472
    %v515 = vrsqrt.pop %v474
    %v516 = vrsqrt.pop %v476
    %v517 = vrsqrt.pop %v478
    %v518 = vrsqrt.pop %v480
    %v519 = vrsqrt.pop %v482
    %v520 = vrsqrt.pop %v484
    %v521 = vrsqrt.pop %v486
    %v522 = vrsqrt.pop %v488
    %v523 = vrsqrt.pop %v490
    %v524 = vrsqrt.pop %v492
    %v525 = vsel %vm493, %v509, 0.0
    %v526 = vsel %vm494, %v510, 0.0
    %v527 = vsel %vm495, %v511, 0.0
    %v528 = vsel %vm496, %v512, 0.0
    %v529 = vsel %vm497, %v513, 0.0
    %v530 = vsel %vm498, %v514, 0.0
    %v531 = vsel %vm499, %v515, 0.0
    %v532 = vsel %vm500, %v516, 0.0
    %v533 = vsel %vm501, %v517, 0.0
    %v534 = vsel %vm502, %v518, 0.0
    %v535 = vsel %vm503, %v519, 0.0
    %v536 = vsel %vm504, %v520, 0.0
    %v537 = vsel %vm505, %v521, 0.0
    %v538 = vsel %vm506, %v522, 0.0
    %v539 = vsel %vm507, %v523, 0.0
    %v540 = vsel %vm508, %v524, 0.0
    %v541 = vmul.f32 %v429, %v525
    %v542 = vmul.f32 %v430, %v526
    %v543 = vmul.f32 %v431, %v527
    %v544 = vmul.f32 %v432, %v528
    %v545 = vmul.f32 %v433, %v529
    %v546 = vmul.f32 %v434, %v530
    %v547 = vmul.f32 %v435, %v531
    %v548 = vmul.f32 %v436, %v532
    %v549 = vmul.f32 %v437, %v533
    %v550 = vmul.f32 %v438, %v534
    %v551 = vmul.f32 %v439, %v535
    %v552 = vmul.f32 %v440, %v536
    %v553 = vmul.f32 %v441, %v537
    %v554 = vmul.f32 %v442, %v538
    %v555 = vmul.f32 %v443, %v539
    %v556 = vmul.f32 %v444, %v540
    %v557 = vpack.c.bf16 %v542, %v541
    %v558 = vpack.c.bf16 %v544, %v543
    %v559 = vpack.c.bf16 %v546, %v545
    %v560 = vpack.c.bf16 %v548, %v547
    %v561 = vpack.c.bf16 %v550, %v549
    %v562 = vpack.c.bf16 %v552, %v551
    %v563 = vpack.c.bf16 %v554, %v553
    %v564 = vpack.c.bf16 %v556, %v555
    %v565 = vld [vmem:[%s3] sm:$0xf]
    %v566 = vld [vmem:[%s3 + $0x4] sm:$0xf]
    %v567 = vld [vmem:[%s3 + $0x8] sm:$0xf]
    %v568 = vld [vmem:[%s3 + $0xc] sm:$0xf]
    %v569 = vld [vmem:[%s3 + $0x10] sm:$0xf]
    %v570 = vld [vmem:[%s3 + $0x14] sm:$0xf]
    %v571 = vld [vmem:[%s3 + $0x18] sm:$0xf]
    %v572 = vld [vmem:[%s3 + $0x1c] sm:$0xf]
    %v573 = vld [vmem:[%s3 + $0x20] sm:$0xf]
    %v574 = vld [vmem:[%s3 + $0x24] sm:$0xf]
    %v575 = vld [vmem:[%s3 + $0x28] sm:$0xf]
    %v576 = vld [vmem:[%s3 + $0x2c] sm:$0xf]
    %v577 = vld [vmem:[%s3 + $0x30] sm:$0xf]
    %v578 = vld [vmem:[%s3 + $0x34] sm:$0xf]
    %v579 = vld [vmem:[%s3 + $0x38] sm:$0xf]
    %v580 = vld [vmem:[%s3 + $0x3c] sm:$0xf]
    %v581 = vld [vmem:[%s4] sm:$0x1]
    %v583 = vlaneseq
    %v584 = vshrl.u32 %v583, 7
    %v585 = vsub.s32 0, %v584
    %v586 = vrot.slane %v581, %v585
    %v604 = vunpack.c.l.b16 %v565
    %v605 = vunpack.c.l.b16 %v566
    %v606 = vunpack.c.l.b16 %v567
    %v607 = vunpack.c.l.b16 %v568
    %v608 = vunpack.c.l.b16 %v569
    %v609 = vunpack.c.l.b16 %v570
    %v610 = vunpack.c.l.b16 %v571
    %v611 = vunpack.c.l.b16 %v572
    %v612 = vunpack.c.l.b16 %v573
    %v613 = vunpack.c.l.b16 %v574
    %v614 = vunpack.c.l.b16 %v575
    %v615 = vunpack.c.l.b16 %v576
    %v616 = vunpack.c.l.b16 %v577
    %v617 = vunpack.c.l.b16 %v578
    %v618 = vunpack.c.l.b16 %v579
    %v619 = vunpack.c.l.b16 %v580
    %v620 = vpack.c.b16 %v605, %v604
    %v621 = vpack.c.b16 %v607, %v606
    %v622 = vpack.c.b16 %v609, %v608
    %v623 = vpack.c.b16 %v611, %v610
    %v624 = vpack.c.b16 %v613, %v612
    %v625 = vpack.c.b16 %v615, %v614
    %v626 = vpack.c.b16 %v617, %v616
    %v627 = vpack.c.b16 %v619, %v618
    %636 = vmatprep.subr.bf16.mxu0 0
    %637 = vmatpush1.bf16.msra.mxu0 %v620
    %638 = vmatprep.subr.bf16.mxu0 0
    %639 = vmatpush1.bf16.msra.mxu0 %v621
    %640 = vmatprep.subr.bf16.mxu0 0
    %641 = vmatpush1.bf16.msra.mxu0 %v622
    %642 = vmatprep.subr.bf16.mxu0 0
    %643 = vmatpush1.bf16.msra.mxu0 %v623
    %644 = vmatprep.subr.bf16.mxu0 0
    %645 = vmatpush1.bf16.msra.mxu0 %v624
    %646 = vmatprep.subr.bf16.mxu0 0
    %647 = vmatpush1.bf16.msra.mxu0 %v625
    %648 = vmatprep.subr.bf16.mxu0 0
    %649 = vmatpush1.bf16.msra.mxu0 %v626
    %650 = vmatprep.subr.bf16.mxu0 0
    %651 = vmatpush1.bf16.msra.mxu0 %v627
    %652 = vmatprep.subr.bf16.mxu0 0
    %653 = vmatpush1.bf16.msra.mxu0 0
    %654 = vmatprep.subr.bf16.mxu0 0
    %655 = vmatpush1.bf16.msra.mxu0 0
    %656 = vmatprep.subr.bf16.mxu0 0
    %657 = vmatpush1.bf16.msra.mxu0 0
    %658 = vmatprep.subr.bf16.mxu0 0
    %659 = vmatpush1.bf16.msra.mxu0 0
    %660 = vmatprep.subr.bf16.mxu0 0
    %661 = vmatpush1.bf16.msra.mxu0 0
    %662 = vmatprep.subr.bf16.mxu0 0
    %663 = vmatpush1.bf16.msra.mxu0 0
    %664 = vmatprep.subr.bf16.mxu0 0
    %665 = vmatpush1.bf16.msra.mxu0 0
    %666 = vmatprep.subr.bf16.mxu0 0
    %667 = vmatpush1.bf16.msra.mxu0 0
    %668 = vmatprep.mubr.bf16.mxu0 0
    %669 = vmatmul.mubr.bf16.gmra.mrb[0].mxu0 %v557
    %v670 = vpop.f32.mrb[0].mxu0
    %v671 = vadd.f32 %v586, %v670
    %v672 = vpop.f32.mrb[0].mxu0
    %v673 = vpop.f32.mrb[0].mxu0
    %v674 = vadd.f32 %v586, %v673
    %v675 = vpop.f32.mrb[0].mxu0
    %676 = vmatprep.mubr.bf16.mxu0 0
    %677 = vmatmul.mubr.bf16.gmra.mrb[0].mxu0 %v558
    %v678 = vpop.f32.mrb[0].mxu0
    %v679 = vadd.f32 %v586, %v678
    %v680 = vpop.f32.mrb[0].mxu0
    %v681 = vpop.f32.mrb[0].mxu0
    %v682 = vadd.f32 %v586, %v681
    %v683 = vpop.f32.mrb[0].mxu0
    %684 = vmatprep.mubr.bf16.mxu0 0
    %685 = vmatmul.mubr.bf16.gmra.mrb[0].mxu0 %v559
    %v686 = vpop.f32.mrb[0].mxu0
    %v687 = vadd.f32 %v586, %v686
    %v688 = vpop.f32.mrb[0].mxu0
    %v689 = vpop.f32.mrb[0].mxu0
    %v690 = vadd.f32 %v586, %v689
    %v691 = vpop.f32.mrb[0].mxu0
    %692 = vmatprep.mubr.bf16.mxu0 0
    %693 = vmatmul.mubr.bf16.gmra.mrb[0].mxu0 %v560
    %v694 = vpop.f32.mrb[0].mxu0
    %v695 = vadd.f32 %v586, %v694
    %v696 = vpop.f32.mrb[0].mxu0
    %v697 = vpop.f32.mrb[0].mxu0
    %v698 = vadd.f32 %v586, %v697
    %v699 = vpop.f32.mrb[0].mxu0
    %700 = vmatprep.mubr.bf16.mxu0 0
    %701 = vmatmul.mubr.bf16.gmra.mrb[0].mxu0 %v561
    %v702 = vpop.f32.mrb[0].mxu0
    %v703 = vadd.f32 %v586, %v702
    %v704 = vpop.f32.mrb[0].mxu0
    %v705 = vpop.f32.mrb[0].mxu0
    %v706 = vadd.f32 %v586, %v705
    %v707 = vpop.f32.mrb[0].mxu0
    %708 = vmatprep.mubr.bf16.mxu0 0
    %709 = vmatmul.mubr.bf16.gmra.mrb[0].mxu0 %v562
    %v710 = vpop.f32.mrb[0].mxu0
    %v711 = vadd.f32 %v586, %v710
    %v712 = vpop.f32.mrb[0].mxu0
    %v713 = vpop.f32.mrb[0].mxu0
    %v714 = vadd.f32 %v586, %v713
    %v715 = vpop.f32.mrb[0].mxu0
    %716 = vmatprep.mubr.bf16.mxu0 0
    %717 = vmatmul.mubr.bf16.gmra.mrb[0].mxu0 %v563
    %v718 = vpop.f32.mrb[0].mxu0
    %v719 = vadd.f32 %v586, %v718
    %v720 = vpop.f32.mrb[0].mxu0
    %v721 = vpop.f32.mrb[0].mxu0
    %v722 = vadd.f32 %v586, %v721
    %v723 = vpop.f32.mrb[0].mxu0
    %724 = vmatprep.mubr.bf16.mxu0 0
    %725 = vmatmul.mubr.bf16.gmra.mrb[0].mxu0 %v564
    %v726 = vpop.f32.mrb[0].mxu0
    %v727 = vadd.f32 %v586, %v726
    %v728 = vpop.f32.mrb[0].mxu0
    %v729 = vpop.f32.mrb[0].mxu0
    %v730 = vadd.f32 %v586, %v729
    %v731 = vpop.f32.mrb[0].mxu0
    %732 = vdwg.mxu0
    %v733 = vmax.f32 %v671, 0.0
    %v734 = vmax.f32 %v674, 0.0
    %v735 = vmax.f32 %v679, 0.0
    %v736 = vmax.f32 %v682, 0.0
    %v737 = vmax.f32 %v687, 0.0
    %v738 = vmax.f32 %v690, 0.0
    %v739 = vmax.f32 %v695, 0.0
    %v740 = vmax.f32 %v698, 0.0
    %v741 = vmax.f32 %v703, 0.0
    %v742 = vmax.f32 %v706, 0.0
    %v743 = vmax.f32 %v711, 0.0
    %v744 = vmax.f32 %v714, 0.0
    %v745 = vmax.f32 %v719, 0.0
    %v746 = vmax.f32 %v722, 0.0
    %v747 = vmax.f32 %v727, 0.0
    %v748 = vmax.f32 %v730, 0.0
    %v749 = vpack.c.bf16 %v734, %v733
    %v750 = vpack.c.bf16 %v736, %v735
    %v751 = vpack.c.bf16 %v738, %v737
    %v752 = vpack.c.bf16 %v740, %v739
    %v753 = vpack.c.bf16 %v742, %v741
    %v754 = vpack.c.bf16 %v744, %v743
    %v755 = vpack.c.bf16 %v746, %v745
    %v756 = vpack.c.bf16 %v748, %v747
    %v765 = vunpack.c.l.b16 %v749
    %v766 = vunpack.c.h.b16 %v749
    %v767 = vunpack.c.l.b16 %v750
    %v768 = vunpack.c.h.b16 %v750
    %v769 = vunpack.c.l.b16 %v751
    %v770 = vunpack.c.h.b16 %v751
    %v771 = vunpack.c.l.b16 %v752
    %v772 = vunpack.c.h.b16 %v752
    %v773 = vunpack.c.l.b16 %v753
    %v774 = vunpack.c.h.b16 %v753
    %v775 = vunpack.c.l.b16 %v754
    %v776 = vunpack.c.h.b16 %v754
    %v777 = vunpack.c.l.b16 %v755
    %v778 = vunpack.c.h.b16 %v755
    %v779 = vunpack.c.l.b16 %v756
    %v780 = vunpack.c.h.b16 %v756
    %v781 = vpack.c.b16 %v765, %v765
    %v782 = vpack.c.b16 %v766, %v766
    %v783 = vpack.c.b16 %v767, %v767
    %v784 = vpack.c.b16 %v768, %v768
    %v785 = vpack.c.b16 %v769, %v769
    %v786 = vpack.c.b16 %v770, %v770
    %v787 = vpack.c.b16 %v771, %v771
    %v788 = vpack.c.b16 %v772, %v772
    %v789 = vpack.c.b16 %v773, %v773
    %v790 = vpack.c.b16 %v774, %v774
    %v791 = vpack.c.b16 %v775, %v775
    %v792 = vpack.c.b16 %v776, %v776
    %v793 = vpack.c.b16 %v777, %v777
    %v794 = vpack.c.b16 %v778, %v778
    %v795 = vpack.c.b16 %v779, %v779
    %v796 = vpack.c.b16 %v780, %v780
    %813 = vst [vmem:[%s5] sm:$0xf] %v781
    %814 = vst [vmem:[%s5 + $0x4] sm:$0xf] %v782
    %815 = vst [vmem:[%s5 + $0x8] sm:$0xf] %v783
    %816 = vst [vmem:[%s5 + $0xc] sm:$0xf] %v784
    %817 = vst [vmem:[%s5 + $0x10] sm:$0xf] %v785
    %818 = vst [vmem:[%s5 + $0x14] sm:$0xf] %v786
    %819 = vst [vmem:[%s5 + $0x18] sm:$0xf] %v787
    %820 = vst [vmem:[%s5 + $0x1c] sm:$0xf] %v788
    %821 = vst [vmem:[%s5 + $0x20] sm:$0xf] %v789
    %822 = vst [vmem:[%s5 + $0x24] sm:$0xf] %v790
    %823 = vst [vmem:[%s5 + $0x28] sm:$0xf] %v791
    %824 = vst [vmem:[%s5 + $0x2c] sm:$0xf] %v792
    %825 = vst [vmem:[%s5 + $0x30] sm:$0xf] %v793
    %826 = vst [vmem:[%s5 + $0x34] sm:$0xf] %v794
    %827 = vst [vmem:[%s5 + $0x38] sm:$0xf] %v795
    %828 = vst [vmem:[%s5 + $0x3c] sm:$0xf] %v796
  $region29: #{unignn_forward.5} parent=0 // pred_fallthru
    _
  // Predicated region
  $region30: #{unignn_forward.5} parent=0 // pred_check
    _
  $region31: #{unignn_forward.5} parent=0 // pred_check_branch
    %830 = sbr.rel (0) target = $region33
  $region32: #{unignn_forward.5} parent=0 // pred_region
    _
  $region33: #{unignn_forward.5} parent=0 // pred_fallthru
    _
  // Predicated region
  $region34: #{unignn_forward.5} parent=0 // pred_check
    _
  $region35: #{unignn_forward.5} parent=0 // pred_check_branch
    %832 = sbr.rel (0) target = $region37
  $region36: #{unignn_forward.5} parent=0 // pred_region
    _
  $region37: #{unignn_forward.5} parent=0 // pred_fallthru
    _

// kernel: unignn_forward.7
$region0: #{unignn_forward.7}
  #allocation0 [shape = 'u32[]', space=smem, size = 0x4, offset = 0x4, fixed_abs, tag = 'smem constant byte address 0x4 - core index']
  #allocation1 [shape = 'u32[144,128]{1,0:T(1,128)}', space=vmem, size = 0x12000, scoped, tag = 'internal scratch']
  #allocation2 [shape = 'f32[128,128]{1,0:T(8,128)}', space=vmem, size = 0x10000, scoped, tag = 'scratch operand']
  %s0 = inlined_call_operand.vmem [shape: bf16[128,128], index: 0, kind: input, shape index: {}]
  %s1 = inlined_call_operand.vmem [shape: bf16[128,128], index: 1, kind: input, shape index: {}]
  %s2 = inlined_call_operand.vmem [shape: f32[128,1], index: 2, kind: input, shape index: {}]
  %s3 = inlined_call_operand.vmem [shape: bf16[128,128], index: 3, kind: input, shape index: {}]
  %s4 = inlined_call_operand.vmem [shape: f32[1,128], index: 4, kind: input, shape index: {}]
  %s5 = inlined_call_operand.vmem [shape: f32[128,128], index: 5, kind: output, shape index: {}]
  %s6 = sld [smem:[#allocation0]]
  $region38: #{unignn_forward.7} parent=0
    _
  %s8 = ssub.s32 1, %s6
  %s9 = scalar_select 0, %s8, %s6
  // Predicated region
  $region2: #{unignn_forward.7} parent=0 // pred_check
    _
  $region3: #{unignn_forward.7} parent=0 // pred_check_branch
    %11 = sbr.rel (0) target = $region5
  $region4: #{unignn_forward.7} parent=0 // pred_region
    _
  $region5: #{unignn_forward.7} parent=0 // pred_fallthru
    _
  // Predicated region
  $region6: #{unignn_forward.7} parent=0 // pred_check
    _
  $region7: #{unignn_forward.7} parent=0 // pred_check_branch
    %13 = sbr.rel (0) target = $region9
  $region8: #{unignn_forward.7} parent=0 // pred_region
    _
  $region9: #{unignn_forward.7} parent=0 // pred_fallthru
    _
  // Predicated region
  $region10: #{unignn_forward.7} parent=0 // pred_check
    _
  $region11: #{unignn_forward.7} parent=0 // pred_check_branch
    %15 = sbr.rel (0) target = $region13
  $region12: #{unignn_forward.7} parent=0 // pred_region
    _
  $region13: #{unignn_forward.7} parent=0 // pred_fallthru
    _
  // Predicated region
  $region14: #{unignn_forward.7} parent=0 // pred_check
    _
  $region15: #{unignn_forward.7} parent=0 // pred_check_branch
    %17 = sbr.rel (0) target = $region17
  $region16: #{unignn_forward.7} parent=0 // pred_region
    _
  $region17: #{unignn_forward.7} parent=0 // pred_fallthru
    _
  // Predicated region
  $region18: #{unignn_forward.7} parent=0 // pred_check
    _
  $region19: #{unignn_forward.7} parent=0 // pred_check_branch
    %19 = sbr.rel (0) target = $region21
  $region20: #{unignn_forward.7} parent=0 // pred_region
    _
  $region21: #{unignn_forward.7} parent=0 // pred_fallthru
    _
  %p21 = scmp.eq.s32.totalorder 0, 0
  // Predicated region
  $region22: #{unignn_forward.7} parent=0 // pred_check
    %p22 = pneg %p21
  $region23: #{unignn_forward.7} parent=0 // pred_check_branch
    %24 = sbr.rel (%p22) target = $region25
  $region24: #{unignn_forward.7} parent=0 // pred_region
    %25 = vst [vmem:[#allocation2] sm:$0xff] 0.0
    %26 = vst [vmem:[#allocation2 + $0x8] sm:$0xff] 0.0
    %27 = vst [vmem:[#allocation2 + $0x10] sm:$0xff] 0.0
    %28 = vst [vmem:[#allocation2 + $0x18] sm:$0xff] 0.0
    %29 = vst [vmem:[#allocation2 + $0x20] sm:$0xff] 0.0
    %30 = vst [vmem:[#allocation2 + $0x28] sm:$0xff] 0.0
    %31 = vst [vmem:[#allocation2 + $0x30] sm:$0xff] 0.0
    %32 = vst [vmem:[#allocation2 + $0x38] sm:$0xff] 0.0
    %33 = vst [vmem:[#allocation2 + $0x40] sm:$0xff] 0.0
    %34 = vst [vmem:[#allocation2 + $0x48] sm:$0xff] 0.0
    %35 = vst [vmem:[#allocation2 + $0x50] sm:$0xff] 0.0
    %36 = vst [vmem:[#allocation2 + $0x58] sm:$0xff] 0.0
    %37 = vst [vmem:[#allocation2 + $0x60] sm:$0xff] 0.0
    %38 = vst [vmem:[#allocation2 + $0x68] sm:$0xff] 0.0
    %39 = vst [vmem:[#allocation2 + $0x70] sm:$0xff] 0.0
    %40 = vst [vmem:[#allocation2 + $0x78] sm:$0xff] 0.0
  $region25: #{unignn_forward.7} parent=0 // pred_fallthru
    _
  %v41 = vld [vmem:[#allocation2] sm:$0xff]
  %v42 = vld [vmem:[#allocation2 + $0x8] sm:$0xff]
  %v43 = vld [vmem:[#allocation2 + $0x10] sm:$0xff]
  %v44 = vld [vmem:[#allocation2 + $0x18] sm:$0xff]
  %v45 = vld [vmem:[#allocation2 + $0x20] sm:$0xff]
  %v46 = vld [vmem:[#allocation2 + $0x28] sm:$0xff]
  %v47 = vld [vmem:[#allocation2 + $0x30] sm:$0xff]
  %v48 = vld [vmem:[#allocation2 + $0x38] sm:$0xff]
  %v49 = vld [vmem:[#allocation2 + $0x40] sm:$0xff]
  %v50 = vld [vmem:[#allocation2 + $0x48] sm:$0xff]
  %v51 = vld [vmem:[#allocation2 + $0x50] sm:$0xff]
  %v52 = vld [vmem:[#allocation2 + $0x58] sm:$0xff]
  %v53 = vld [vmem:[#allocation2 + $0x60] sm:$0xff]
  %v54 = vld [vmem:[#allocation2 + $0x68] sm:$0xff]
  %v55 = vld [vmem:[#allocation2 + $0x70] sm:$0xff]
  %v56 = vld [vmem:[#allocation2 + $0x78] sm:$0xff]
  %v57 = vld [vmem:[%s0] sm:$0xf]
  %v58 = vld [vmem:[%s0 + $0x4] sm:$0xf]
  %v59 = vld [vmem:[%s0 + $0x8] sm:$0xf]
  %v60 = vld [vmem:[%s0 + $0xc] sm:$0xf]
  %v61 = vld [vmem:[%s0 + $0x10] sm:$0xf]
  %v62 = vld [vmem:[%s0 + $0x14] sm:$0xf]
  %v63 = vld [vmem:[%s0 + $0x18] sm:$0xf]
  %v64 = vld [vmem:[%s0 + $0x1c] sm:$0xf]
  %v65 = vld [vmem:[%s0 + $0x20] sm:$0xf]
  %v66 = vld [vmem:[%s0 + $0x24] sm:$0xf]
  %v67 = vld [vmem:[%s0 + $0x28] sm:$0xf]
  %v68 = vld [vmem:[%s0 + $0x2c] sm:$0xf]
  %v69 = vld [vmem:[%s0 + $0x30] sm:$0xf]
  %v70 = vld [vmem:[%s0 + $0x34] sm:$0xf]
  %v71 = vld [vmem:[%s0 + $0x38] sm:$0xf]
  %v72 = vld [vmem:[%s0 + $0x3c] sm:$0xf]
  %v73 = vld [vmem:[%s1] sm:$0xf]
  %v74 = vld [vmem:[%s1 + $0x4] sm:$0xf]
  %v75 = vld [vmem:[%s1 + $0x8] sm:$0xf]
  %v76 = vld [vmem:[%s1 + $0xc] sm:$0xf]
  %v77 = vld [vmem:[%s1 + $0x10] sm:$0xf]
  %v78 = vld [vmem:[%s1 + $0x14] sm:$0xf]
  %v79 = vld [vmem:[%s1 + $0x18] sm:$0xf]
  %v80 = vld [vmem:[%s1 + $0x1c] sm:$0xf]
  %v81 = vld [vmem:[%s1 + $0x20] sm:$0xf]
  %v82 = vld [vmem:[%s1 + $0x24] sm:$0xf]
  %v83 = vld [vmem:[%s1 + $0x28] sm:$0xf]
  %v84 = vld [vmem:[%s1 + $0x2c] sm:$0xf]
  %v85 = vld [vmem:[%s1 + $0x30] sm:$0xf]
  %v86 = vld [vmem:[%s1 + $0x34] sm:$0xf]
  %v87 = vld [vmem:[%s1 + $0x38] sm:$0xf]
  %v88 = vld [vmem:[%s1 + $0x3c] sm:$0xf]
  %v105 = vunpack.c.l.b16 %v57
  %v106 = vunpack.c.l.b16 %v58
  %v107 = vunpack.c.l.b16 %v59
  %v108 = vunpack.c.l.b16 %v60
  %v109 = vunpack.c.l.b16 %v61
  %v110 = vunpack.c.l.b16 %v62
  %v111 = vunpack.c.l.b16 %v63
  %v112 = vunpack.c.l.b16 %v64
  %v113 = vunpack.c.l.b16 %v65
  %v114 = vunpack.c.l.b16 %v66
  %v115 = vunpack.c.l.b16 %v67
  %v116 = vunpack.c.l.b16 %v68
  %v117 = vunpack.c.l.b16 %v69
  %v118 = vunpack.c.l.b16 %v70
  %v119 = vunpack.c.l.b16 %v71
  %v120 = vunpack.c.l.b16 %v72
  %v121 = vpack.c.b16 %v106, %v105
  %v122 = vpack.c.b16 %v108, %v107
  %v123 = vpack.c.b16 %v110, %v109
  %v124 = vpack.c.b16 %v112, %v111
  %v125 = vpack.c.b16 %v114, %v113
  %v126 = vpack.c.b16 %v116, %v115
  %v127 = vpack.c.b16 %v118, %v117
  %v128 = vpack.c.b16 %v120, %v119
  %v153 = vunpack.c.l.b16 %v73
  %v154 = vunpack.c.l.b16 %v74
  %v155 = vunpack.c.l.b16 %v75
  %v156 = vunpack.c.l.b16 %v76
  %v157 = vunpack.c.l.b16 %v77
  %v158 = vunpack.c.l.b16 %v78
  %v159 = vunpack.c.l.b16 %v79
  %v160 = vunpack.c.l.b16 %v80
  %v161 = vunpack.c.l.b16 %v81
  %v162 = vunpack.c.l.b16 %v82
  %v163 = vunpack.c.l.b16 %v83
  %v164 = vunpack.c.l.b16 %v84
  %v165 = vunpack.c.l.b16 %v85
  %v166 = vunpack.c.l.b16 %v86
  %v167 = vunpack.c.l.b16 %v87
  %v168 = vunpack.c.l.b16 %v88
  %v169 = vpack.c.b16 %v154, %v153
  %v170 = vpack.c.b16 %v156, %v155
  %v171 = vpack.c.b16 %v158, %v157
  %v172 = vpack.c.b16 %v160, %v159
  %v173 = vpack.c.b16 %v162, %v161
  %v174 = vpack.c.b16 %v164, %v163
  %v175 = vpack.c.b16 %v166, %v165
  %v176 = vpack.c.b16 %v168, %v167
  %185 = vmatprep.subr.bf16.mxu0 0
  %186 = vmatpush1.bf16.msra.mxu0 %v169
  %187 = vmatprep.subr.bf16.mxu0 0
  %188 = vmatpush1.bf16.msra.mxu0 %v170
  %189 = vmatprep.subr.bf16.mxu0 0
  %190 = vmatpush1.bf16.msra.mxu0 %v171
  %191 = vmatprep.subr.bf16.mxu0 0
  %192 = vmatpush1.bf16.msra.mxu0 %v172
  %193 = vmatprep.subr.bf16.mxu0 0
  %194 = vmatpush1.bf16.msra.mxu0 %v173
  %195 = vmatprep.subr.bf16.mxu0 0
  %196 = vmatpush1.bf16.msra.mxu0 %v174
  %197 = vmatprep.subr.bf16.mxu0 0
  %198 = vmatpush1.bf16.msra.mxu0 %v175
  %199 = vmatprep.subr.bf16.mxu0 0
  %200 = vmatpush1.bf16.msra.mxu0 %v176
  %201 = vmatprep.subr.bf16.mxu0 0
  %202 = vmatpush1.bf16.msra.mxu0 0
  %203 = vmatprep.subr.bf16.mxu0 0
  %204 = vmatpush1.bf16.msra.mxu0 0
  %205 = vmatprep.subr.bf16.mxu0 0
  %206 = vmatpush1.bf16.msra.mxu0 0
  %207 = vmatprep.subr.bf16.mxu0 0
  %208 = vmatpush1.bf16.msra.mxu0 0
  %209 = vmatprep.subr.bf16.mxu0 0
  %210 = vmatpush1.bf16.msra.mxu0 0
  %211 = vmatprep.subr.bf16.mxu0 0
  %212 = vmatpush1.bf16.msra.mxu0 0
  %213 = vmatprep.subr.bf16.mxu0 0
  %214 = vmatpush1.bf16.msra.mxu0 0
  %215 = vmatprep.subr.bf16.mxu0 0
  %216 = vmatpush1.bf16.msra.mxu0 0
  %217 = vmatprep.mubr.bf16.mxu0 0
  %218 = vmatmul.mubr.bf16.gmra.mrb[0].mxu0 %v121
  %v219 = vpop.f32.mrb[0].mxu0
  %v220 = vadd.f32 0.0, %v219
  %v221 = vpop.f32.mrb[0].mxu0
  %v222 = vpop.f32.mrb[0].mxu0
  %v223 = vadd.f32 0.0, %v222
  %v224 = vpop.f32.mrb[0].mxu0
  %225 = vmatprep.mubr.bf16.mxu0 0
  %226 = vmatmul.mubr.bf16.gmra.mrb[0].mxu0 %v122
  %v227 = vpop.f32.mrb[0].mxu0
  %v228 = vadd.f32 0.0, %v227
  %v229 = vpop.f32.mrb[0].mxu0
  %v230 = vpop.f32.mrb[0].mxu0
  %v231 = vadd.f32 0.0, %v230
  %v232 = vpop.f32.mrb[0].mxu0
  %233 = vmatprep.mubr.bf16.mxu0 0
  %234 = vmatmul.mubr.bf16.gmra.mrb[0].mxu0 %v123
  %v235 = vpop.f32.mrb[0].mxu0
  %v236 = vadd.f32 0.0, %v235
  %v237 = vpop.f32.mrb[0].mxu0
  %v238 = vpop.f32.mrb[0].mxu0
  %v239 = vadd.f32 0.0, %v238
  %v240 = vpop.f32.mrb[0].mxu0
  %241 = vmatprep.mubr.bf16.mxu0 0
  %242 = vmatmul.mubr.bf16.gmra.mrb[0].mxu0 %v124
  %v243 = vpop.f32.mrb[0].mxu0
  %v244 = vadd.f32 0.0, %v243
  %v245 = vpop.f32.mrb[0].mxu0
  %v246 = vpop.f32.mrb[0].mxu0
  %v247 = vadd.f32 0.0, %v246
  %v248 = vpop.f32.mrb[0].mxu0
  %249 = vmatprep.mubr.bf16.mxu0 0
  %250 = vmatmul.mubr.bf16.gmra.mrb[0].mxu0 %v125
  %v251 = vpop.f32.mrb[0].mxu0
  %v252 = vadd.f32 0.0, %v251
  %v253 = vpop.f32.mrb[0].mxu0
  %v254 = vpop.f32.mrb[0].mxu0
  %v255 = vadd.f32 0.0, %v254
  %v256 = vpop.f32.mrb[0].mxu0
  %257 = vmatprep.mubr.bf16.mxu0 0
  %258 = vmatmul.mubr.bf16.gmra.mrb[0].mxu0 %v126
  %v259 = vpop.f32.mrb[0].mxu0
  %v260 = vadd.f32 0.0, %v259
  %v261 = vpop.f32.mrb[0].mxu0
  %v262 = vpop.f32.mrb[0].mxu0
  %v263 = vadd.f32 0.0, %v262
  %v264 = vpop.f32.mrb[0].mxu0
  %265 = vmatprep.mubr.bf16.mxu0 0
  %266 = vmatmul.mubr.bf16.gmra.mrb[0].mxu0 %v127
  %v267 = vpop.f32.mrb[0].mxu0
  %v268 = vadd.f32 0.0, %v267
  %v269 = vpop.f32.mrb[0].mxu0
  %v270 = vpop.f32.mrb[0].mxu0
  %v271 = vadd.f32 0.0, %v270
  %v272 = vpop.f32.mrb[0].mxu0
  %273 = vmatprep.mubr.bf16.mxu0 0
  %274 = vmatmul.mubr.bf16.gmra.mrb[0].mxu0 %v128
  %v275 = vpop.f32.mrb[0].mxu0
  %v276 = vadd.f32 0.0, %v275
  %v277 = vpop.f32.mrb[0].mxu0
  %v278 = vpop.f32.mrb[0].mxu0
  %v279 = vadd.f32 0.0, %v278
  %v280 = vpop.f32.mrb[0].mxu0
  %281 = vdwg.mxu0
  %v282 = vadd.f32 %v41, %v220
  %v283 = vadd.f32 %v42, %v223
  %v284 = vadd.f32 %v43, %v228
  %v285 = vadd.f32 %v44, %v231
  %v286 = vadd.f32 %v45, %v236
  %v287 = vadd.f32 %v46, %v239
  %v288 = vadd.f32 %v47, %v244
  %v289 = vadd.f32 %v48, %v247
  %v290 = vadd.f32 %v49, %v252
  %v291 = vadd.f32 %v50, %v255
  %v292 = vadd.f32 %v51, %v260
  %v293 = vadd.f32 %v52, %v263
  %v294 = vadd.f32 %v53, %v268
  %v295 = vadd.f32 %v54, %v271
  %v296 = vadd.f32 %v55, %v276
  %v297 = vadd.f32 %v56, %v279
  %298 = vst [vmem:[#allocation2] sm:$0xff] %v282
  %299 = vst [vmem:[#allocation2 + $0x8] sm:$0xff] %v283
  %300 = vst [vmem:[#allocation2 + $0x10] sm:$0xff] %v284
  %301 = vst [vmem:[#allocation2 + $0x18] sm:$0xff] %v285
  %302 = vst [vmem:[#allocation2 + $0x20] sm:$0xff] %v286
  %303 = vst [vmem:[#allocation2 + $0x28] sm:$0xff] %v287
  %304 = vst [vmem:[#allocation2 + $0x30] sm:$0xff] %v288
  %305 = vst [vmem:[#allocation2 + $0x38] sm:$0xff] %v289
  %306 = vst [vmem:[#allocation2 + $0x40] sm:$0xff] %v290
  %307 = vst [vmem:[#allocation2 + $0x48] sm:$0xff] %v291
  %308 = vst [vmem:[#allocation2 + $0x50] sm:$0xff] %v292
  %309 = vst [vmem:[#allocation2 + $0x58] sm:$0xff] %v293
  %310 = vst [vmem:[#allocation2 + $0x60] sm:$0xff] %v294
  %311 = vst [vmem:[#allocation2 + $0x68] sm:$0xff] %v295
  %312 = vst [vmem:[#allocation2 + $0x70] sm:$0xff] %v296
  %313 = vst [vmem:[#allocation2 + $0x78] sm:$0xff] %v297
  // Predicated region
  $region26: #{unignn_forward.7} parent=0 // pred_check
    %p314 = pneg %p21
  $region27: #{unignn_forward.7} parent=0 // pred_check_branch
    %316 = sbr.rel (%p314) target = $region29
  $region28: #{unignn_forward.7} parent=0 // pred_region
    %v317 = vld [vmem:[#allocation2] sm:$0xff]
    %v318 = vld [vmem:[#allocation2 + $0x8] sm:$0xff]
    %v319 = vld [vmem:[#allocation2 + $0x10] sm:$0xff]
    %v320 = vld [vmem:[#allocation2 + $0x18] sm:$0xff]
    %v321 = vld [vmem:[#allocation2 + $0x20] sm:$0xff]
    %v322 = vld [vmem:[#allocation2 + $0x28] sm:$0xff]
    %v323 = vld [vmem:[#allocation2 + $0x30] sm:$0xff]
    %v324 = vld [vmem:[#allocation2 + $0x38] sm:$0xff]
    %v325 = vld [vmem:[#allocation2 + $0x40] sm:$0xff]
    %v326 = vld [vmem:[#allocation2 + $0x48] sm:$0xff]
    %v327 = vld [vmem:[#allocation2 + $0x50] sm:$0xff]
    %v328 = vld [vmem:[#allocation2 + $0x58] sm:$0xff]
    %v329 = vld [vmem:[#allocation2 + $0x60] sm:$0xff]
    %v330 = vld [vmem:[#allocation2 + $0x68] sm:$0xff]
    %v331 = vld [vmem:[#allocation2 + $0x70] sm:$0xff]
    %v332 = vld [vmem:[#allocation2 + $0x78] sm:$0xff]
    %v333 = vld [vmem:[%s2] sm:$0xff]
    %v334 = vld [vmem:[%s2 + $0x8] sm:$0xff]
    %v335 = vld [vmem:[%s2 + $0x10] sm:$0xff]
    %v336 = vld [vmem:[%s2 + $0x18] sm:$0xff]
    %v337 = vld [vmem:[%s2 + $0x20] sm:$0xff]
    %v338 = vld [vmem:[%s2 + $0x28] sm:$0xff]
    %v339 = vld [vmem:[%s2 + $0x30] sm:$0xff]
    %v340 = vld [vmem:[%s2 + $0x38] sm:$0xff]
    %v341 = vld [vmem:[%s2 + $0x40] sm:$0xff]
    %v342 = vld [vmem:[%s2 + $0x48] sm:$0xff]
    %v343 = vld [vmem:[%s2 + $0x50] sm:$0xff]
    %v344 = vld [vmem:[%s2 + $0x58] sm:$0xff]
    %v345 = vld [vmem:[%s2 + $0x60] sm:$0xff]
    %v346 = vld [vmem:[%s2 + $0x68] sm:$0xff]
    %v347 = vld [vmem:[%s2 + $0x70] sm:$0xff]
    %v348 = vld [vmem:[%s2 + $0x78] sm:$0xff]
    %350 = vset.pattern.permute.xlu0 0
    %351 = vperm.xlu0 %350, %v333
    %v352 = vpop.permute.xlu0 %351
    %355 = vset.pattern.permute.xlu0 0
    %356 = vperm.xlu0 %355, %v334
    %v357 = vpop.permute.xlu0 %356
    %360 = vset.pattern.permute.xlu0 0
    %361 = vperm.xlu0 %360, %v335
    %v362 = vpop.permute.xlu0 %361
    %365 = vset.pattern.permute.xlu0 0
    %366 = vperm.xlu0 %365, %v336
    %v367 = vpop.permute.xlu0 %366
    %370 = vset.pattern.permute.xlu0 0
    %371 = vperm.xlu0 %370, %v337
    %v372 = vpop.permute.xlu0 %371
    %375 = vset.pattern.permute.xlu0 0
    %376 = vperm.xlu0 %375, %v338
    %v377 = vpop.permute.xlu0 %376
    %380 = vset.pattern.permute.xlu0 0
    %381 = vperm.xlu0 %380, %v339
    %v382 = vpop.permute.xlu0 %381
    %385 = vset.pattern.permute.xlu0 0
    %386 = vperm.xlu0 %385, %v340
    %v387 = vpop.permute.xlu0 %386
    %390 = vset.pattern.permute.xlu0 0
    %391 = vperm.xlu0 %390, %v341
    %v392 = vpop.permute.xlu0 %391
    %395 = vset.pattern.permute.xlu0 0
    %396 = vperm.xlu0 %395, %v342
    %v397 = vpop.permute.xlu0 %396
    %400 = vset.pattern.permute.xlu0 0
    %401 = vperm.xlu0 %400, %v343
    %v402 = vpop.permute.xlu0 %401
    %405 = vset.pattern.permute.xlu0 0
    %406 = vperm.xlu0 %405, %v344
    %v407 = vpop.permute.xlu0 %406
    %410 = vset.pattern.permute.xlu0 0
    %411 = vperm.xlu0 %410, %v345
    %v412 = vpop.permute.xlu0 %411
    %415 = vset.pattern.permute.xlu0 0
    %416 = vperm.xlu0 %415, %v346
    %v417 = vpop.permute.xlu0 %416
    %420 = vset.pattern.permute.xlu0 0
    %421 = vperm.xlu0 %420, %v347
    %v422 = vpop.permute.xlu0 %421
    %425 = vset.pattern.permute.xlu0 0
    %426 = vperm.xlu0 %425, %v348
    %v427 = vpop.permute.xlu0 %426
    %v429 = vmul.f32 %v317, %v352
    %v430 = vmul.f32 %v318, %v357
    %v431 = vmul.f32 %v319, %v362
    %v432 = vmul.f32 %v320, %v367
    %v433 = vmul.f32 %v321, %v372
    %v434 = vmul.f32 %v322, %v377
    %v435 = vmul.f32 %v323, %v382
    %v436 = vmul.f32 %v324, %v387
    %v437 = vmul.f32 %v325, %v392
    %v438 = vmul.f32 %v326, %v397
    %v439 = vmul.f32 %v327, %v402
    %v440 = vmul.f32 %v328, %v407
    %v441 = vmul.f32 %v329, %v412
    %v442 = vmul.f32 %v330, %v417
    %v443 = vmul.f32 %v331, %v422
    %v444 = vmul.f32 %v332, %v427
    %v445 = vmul.f32 %v429, %v429
    %v446 = vmul.f32 %v430, %v430
    %v447 = vmul.f32 %v431, %v431
    %v448 = vmul.f32 %v432, %v432
    %v449 = vmul.f32 %v433, %v433
    %v450 = vmul.f32 %v434, %v434
    %v451 = vmul.f32 %v435, %v435
    %v452 = vmul.f32 %v436, %v436
    %v453 = vmul.f32 %v437, %v437
    %v454 = vmul.f32 %v438, %v438
    %v455 = vmul.f32 %v439, %v439
    %v456 = vmul.f32 %v440, %v440
    %v457 = vmul.f32 %v441, %v441
    %v458 = vmul.f32 %v442, %v442
    %v459 = vmul.f32 %v443, %v443
    %v460 = vmul.f32 %v444, %v444
    %461 = vadd.xlane.f32.xlu0 %v445
    %v462 = vpop.xlane.xlu0 %461
    %463 = vadd.xlane.f32.xlu0 %v446
    %v464 = vpop.xlane.xlu0 %463
    %465 = vadd.xlane.f32.xlu0 %v447
    %v466 = vpop.xlane.xlu0 %465
    %467 = vadd.xlane.f32.xlu0 %v448
    %v468 = vpop.xlane.xlu0 %467
    %469 = vadd.xlane.f32.xlu0 %v449
    %v470 = vpop.xlane.xlu0 %469
    %471 = vadd.xlane.f32.xlu0 %v450
    %v472 = vpop.xlane.xlu0 %471
    %473 = vadd.xlane.f32.xlu0 %v451
    %v474 = vpop.xlane.xlu0 %473
    %475 = vadd.xlane.f32.xlu0 %v452
    %v476 = vpop.xlane.xlu0 %475
    %477 = vadd.xlane.f32.xlu0 %v453
    %v478 = vpop.xlane.xlu0 %477
    %479 = vadd.xlane.f32.xlu0 %v454
    %v480 = vpop.xlane.xlu0 %479
    %481 = vadd.xlane.f32.xlu0 %v455
    %v482 = vpop.xlane.xlu0 %481
    %483 = vadd.xlane.f32.xlu0 %v456
    %v484 = vpop.xlane.xlu0 %483
    %485 = vadd.xlane.f32.xlu0 %v457
    %v486 = vpop.xlane.xlu0 %485
    %487 = vadd.xlane.f32.xlu0 %v458
    %v488 = vpop.xlane.xlu0 %487
    %489 = vadd.xlane.f32.xlu0 %v459
    %v490 = vpop.xlane.xlu0 %489
    %491 = vadd.xlane.f32.xlu0 %v460
    %v492 = vpop.xlane.xlu0 %491
    %vm493 = vcmp.gt.f32.partialorder %v462, 0.0
    %vm494 = vcmp.gt.f32.partialorder %v464, 0.0
    %vm495 = vcmp.gt.f32.partialorder %v466, 0.0
    %vm496 = vcmp.gt.f32.partialorder %v468, 0.0
    %vm497 = vcmp.gt.f32.partialorder %v470, 0.0
    %vm498 = vcmp.gt.f32.partialorder %v472, 0.0
    %vm499 = vcmp.gt.f32.partialorder %v474, 0.0
    %vm500 = vcmp.gt.f32.partialorder %v476, 0.0
    %vm501 = vcmp.gt.f32.partialorder %v478, 0.0
    %vm502 = vcmp.gt.f32.partialorder %v480, 0.0
    %vm503 = vcmp.gt.f32.partialorder %v482, 0.0
    %vm504 = vcmp.gt.f32.partialorder %v484, 0.0
    %vm505 = vcmp.gt.f32.partialorder %v486, 0.0
    %vm506 = vcmp.gt.f32.partialorder %v488, 0.0
    %vm507 = vcmp.gt.f32.partialorder %v490, 0.0
    %vm508 = vcmp.gt.f32.partialorder %v492, 0.0
    %v509 = vrsqrt.pop %v462
    %v510 = vrsqrt.pop %v464
    %v511 = vrsqrt.pop %v466
    %v512 = vrsqrt.pop %v468
    %v513 = vrsqrt.pop %v470
    %v514 = vrsqrt.pop %v472
    %v515 = vrsqrt.pop %v474
    %v516 = vrsqrt.pop %v476
    %v517 = vrsqrt.pop %v478
    %v518 = vrsqrt.pop %v480
    %v519 = vrsqrt.pop %v482
    %v520 = vrsqrt.pop %v484
    %v521 = vrsqrt.pop %v486
    %v522 = vrsqrt.pop %v488
    %v523 = vrsqrt.pop %v490
    %v524 = vrsqrt.pop %v492
    %v525 = vsel %vm493, %v509, 0.0
    %v526 = vsel %vm494, %v510, 0.0
    %v527 = vsel %vm495, %v511, 0.0
    %v528 = vsel %vm496, %v512, 0.0
    %v529 = vsel %vm497, %v513, 0.0
    %v530 = vsel %vm498, %v514, 0.0
    %v531 = vsel %vm499, %v515, 0.0
    %v532 = vsel %vm500, %v516, 0.0
    %v533 = vsel %vm501, %v517, 0.0
    %v534 = vsel %vm502, %v518, 0.0
    %v535 = vsel %vm503, %v519, 0.0
    %v536 = vsel %vm504, %v520, 0.0
    %v537 = vsel %vm505, %v521, 0.0
    %v538 = vsel %vm506, %v522, 0.0
    %v539 = vsel %vm507, %v523, 0.0
    %v540 = vsel %vm508, %v524, 0.0
    %v541 = vmul.f32 %v429, %v525
    %v542 = vmul.f32 %v430, %v526
    %v543 = vmul.f32 %v431, %v527
    %v544 = vmul.f32 %v432, %v528
    %v545 = vmul.f32 %v433, %v529
    %v546 = vmul.f32 %v434, %v530
    %v547 = vmul.f32 %v435, %v531
    %v548 = vmul.f32 %v436, %v532
    %v549 = vmul.f32 %v437, %v533
    %v550 = vmul.f32 %v438, %v534
    %v551 = vmul.f32 %v439, %v535
    %v552 = vmul.f32 %v440, %v536
    %v553 = vmul.f32 %v441, %v537
    %v554 = vmul.f32 %v442, %v538
    %v555 = vmul.f32 %v443, %v539
    %v556 = vmul.f32 %v444, %v540
    %v557 = vpack.c.bf16 %v542, %v541
    %v558 = vpack.c.bf16 %v544, %v543
    %v559 = vpack.c.bf16 %v546, %v545
    %v560 = vpack.c.bf16 %v548, %v547
    %v561 = vpack.c.bf16 %v550, %v549
    %v562 = vpack.c.bf16 %v552, %v551
    %v563 = vpack.c.bf16 %v554, %v553
    %v564 = vpack.c.bf16 %v556, %v555
    %v565 = vld [vmem:[%s3] sm:$0xf]
    %v566 = vld [vmem:[%s3 + $0x4] sm:$0xf]
    %v567 = vld [vmem:[%s3 + $0x8] sm:$0xf]
    %v568 = vld [vmem:[%s3 + $0xc] sm:$0xf]
    %v569 = vld [vmem:[%s3 + $0x10] sm:$0xf]
    %v570 = vld [vmem:[%s3 + $0x14] sm:$0xf]
    %v571 = vld [vmem:[%s3 + $0x18] sm:$0xf]
    %v572 = vld [vmem:[%s3 + $0x1c] sm:$0xf]
    %v573 = vld [vmem:[%s3 + $0x20] sm:$0xf]
    %v574 = vld [vmem:[%s3 + $0x24] sm:$0xf]
    %v575 = vld [vmem:[%s3 + $0x28] sm:$0xf]
    %v576 = vld [vmem:[%s3 + $0x2c] sm:$0xf]
    %v577 = vld [vmem:[%s3 + $0x30] sm:$0xf]
    %v578 = vld [vmem:[%s3 + $0x34] sm:$0xf]
    %v579 = vld [vmem:[%s3 + $0x38] sm:$0xf]
    %v580 = vld [vmem:[%s3 + $0x3c] sm:$0xf]
    %v581 = vld [vmem:[%s4] sm:$0x1]
    %v583 = vlaneseq
    %v584 = vshrl.u32 %v583, 7
    %v585 = vsub.s32 0, %v584
    %v586 = vrot.slane %v581, %v585
    %v604 = vunpack.c.l.b16 %v565
    %v605 = vunpack.c.l.b16 %v566
    %v606 = vunpack.c.l.b16 %v567
    %v607 = vunpack.c.l.b16 %v568
    %v608 = vunpack.c.l.b16 %v569
    %v609 = vunpack.c.l.b16 %v570
    %v610 = vunpack.c.l.b16 %v571
    %v611 = vunpack.c.l.b16 %v572
    %v612 = vunpack.c.l.b16 %v573
    %v613 = vunpack.c.l.b16 %v574
    %v614 = vunpack.c.l.b16 %v575
    %v615 = vunpack.c.l.b16 %v576
    %v616 = vunpack.c.l.b16 %v577
    %v617 = vunpack.c.l.b16 %v578
    %v618 = vunpack.c.l.b16 %v579
    %v619 = vunpack.c.l.b16 %v580
    %v620 = vpack.c.b16 %v605, %v604
    %v621 = vpack.c.b16 %v607, %v606
    %v622 = vpack.c.b16 %v609, %v608
    %v623 = vpack.c.b16 %v611, %v610
    %v624 = vpack.c.b16 %v613, %v612
    %v625 = vpack.c.b16 %v615, %v614
    %v626 = vpack.c.b16 %v617, %v616
    %v627 = vpack.c.b16 %v619, %v618
    %636 = vmatprep.subr.bf16.mxu0 0
    %637 = vmatpush1.bf16.msra.mxu0 %v620
    %638 = vmatprep.subr.bf16.mxu0 0
    %639 = vmatpush1.bf16.msra.mxu0 %v621
    %640 = vmatprep.subr.bf16.mxu0 0
    %641 = vmatpush1.bf16.msra.mxu0 %v622
    %642 = vmatprep.subr.bf16.mxu0 0
    %643 = vmatpush1.bf16.msra.mxu0 %v623
    %644 = vmatprep.subr.bf16.mxu0 0
    %645 = vmatpush1.bf16.msra.mxu0 %v624
    %646 = vmatprep.subr.bf16.mxu0 0
    %647 = vmatpush1.bf16.msra.mxu0 %v625
    %648 = vmatprep.subr.bf16.mxu0 0
    %649 = vmatpush1.bf16.msra.mxu0 %v626
    %650 = vmatprep.subr.bf16.mxu0 0
    %651 = vmatpush1.bf16.msra.mxu0 %v627
    %652 = vmatprep.subr.bf16.mxu0 0
    %653 = vmatpush1.bf16.msra.mxu0 0
    %654 = vmatprep.subr.bf16.mxu0 0
    %655 = vmatpush1.bf16.msra.mxu0 0
    %656 = vmatprep.subr.bf16.mxu0 0
    %657 = vmatpush1.bf16.msra.mxu0 0
    %658 = vmatprep.subr.bf16.mxu0 0
    %659 = vmatpush1.bf16.msra.mxu0 0
    %660 = vmatprep.subr.bf16.mxu0 0
    %661 = vmatpush1.bf16.msra.mxu0 0
    %662 = vmatprep.subr.bf16.mxu0 0
    %663 = vmatpush1.bf16.msra.mxu0 0
    %664 = vmatprep.subr.bf16.mxu0 0
    %665 = vmatpush1.bf16.msra.mxu0 0
    %666 = vmatprep.subr.bf16.mxu0 0
    %667 = vmatpush1.bf16.msra.mxu0 0
    %668 = vmatprep.mubr.bf16.mxu0 0
    %669 = vmatmul.mubr.bf16.gmra.mrb[0].mxu0 %v557
    %v670 = vpop.f32.mrb[0].mxu0
    %v671 = vadd.f32 %v586, %v670
    %v672 = vpop.f32.mrb[0].mxu0
    %v673 = vpop.f32.mrb[0].mxu0
    %v674 = vadd.f32 %v586, %v673
    %v675 = vpop.f32.mrb[0].mxu0
    %676 = vmatprep.mubr.bf16.mxu0 0
    %677 = vmatmul.mubr.bf16.gmra.mrb[0].mxu0 %v558
    %v678 = vpop.f32.mrb[0].mxu0
    %v679 = vadd.f32 %v586, %v678
    %v680 = vpop.f32.mrb[0].mxu0
    %v681 = vpop.f32.mrb[0].mxu0
    %v682 = vadd.f32 %v586, %v681
    %v683 = vpop.f32.mrb[0].mxu0
    %684 = vmatprep.mubr.bf16.mxu0 0
    %685 = vmatmul.mubr.bf16.gmra.mrb[0].mxu0 %v559
    %v686 = vpop.f32.mrb[0].mxu0
    %v687 = vadd.f32 %v586, %v686
    %v688 = vpop.f32.mrb[0].mxu0
    %v689 = vpop.f32.mrb[0].mxu0
    %v690 = vadd.f32 %v586, %v689
    %v691 = vpop.f32.mrb[0].mxu0
    %692 = vmatprep.mubr.bf16.mxu0 0
    %693 = vmatmul.mubr.bf16.gmra.mrb[0].mxu0 %v560
    %v694 = vpop.f32.mrb[0].mxu0
    %v695 = vadd.f32 %v586, %v694
    %v696 = vpop.f32.mrb[0].mxu0
    %v697 = vpop.f32.mrb[0].mxu0
    %v698 = vadd.f32 %v586, %v697
    %v699 = vpop.f32.mrb[0].mxu0
    %700 = vmatprep.mubr.bf16.mxu0 0
    %701 = vmatmul.mubr.bf16.gmra.mrb[0].mxu0 %v561
    %v702 = vpop.f32.mrb[0].mxu0
    %v703 = vadd.f32 %v586, %v702
    %v704 = vpop.f32.mrb[0].mxu0
    %v705 = vpop.f32.mrb[0].mxu0
    %v706 = vadd.f32 %v586, %v705
    %v707 = vpop.f32.mrb[0].mxu0
    %708 = vmatprep.mubr.bf16.mxu0 0
    %709 = vmatmul.mubr.bf16.gmra.mrb[0].mxu0 %v562
    %v710 = vpop.f32.mrb[0].mxu0
    %v711 = vadd.f32 %v586, %v710
    %v712 = vpop.f32.mrb[0].mxu0
    %v713 = vpop.f32.mrb[0].mxu0
    %v714 = vadd.f32 %v586, %v713
    %v715 = vpop.f32.mrb[0].mxu0
    %716 = vmatprep.mubr.bf16.mxu0 0
    %717 = vmatmul.mubr.bf16.gmra.mrb[0].mxu0 %v563
    %v718 = vpop.f32.mrb[0].mxu0
    %v719 = vadd.f32 %v586, %v718
    %v720 = vpop.f32.mrb[0].mxu0
    %v721 = vpop.f32.mrb[0].mxu0
    %v722 = vadd.f32 %v586, %v721
    %v723 = vpop.f32.mrb[0].mxu0
    %724 = vmatprep.mubr.bf16.mxu0 0
    %725 = vmatmul.mubr.bf16.gmra.mrb[0].mxu0 %v564
    %v726 = vpop.f32.mrb[0].mxu0
    %v727 = vadd.f32 %v586, %v726
    %v728 = vpop.f32.mrb[0].mxu0
    %v729 = vpop.f32.mrb[0].mxu0
    %v730 = vadd.f32 %v586, %v729
    %v731 = vpop.f32.mrb[0].mxu0
    %732 = vdwg.mxu0
    %v733 = vlaneseq
    %v734 = vand.u32 %v733, 127
    %vm735 = vcmp.lt.s32.totalorder %v734, 4
    %v736 = vsel %vm735, %v671, -inf
    %v737 = vsel %vm735, %v674, -inf
    %v738 = vsel %vm735, %v679, -inf
    %v739 = vsel %vm735, %v682, -inf
    %v740 = vsel %vm735, %v687, -inf
    %v741 = vsel %vm735, %v690, -inf
    %v742 = vsel %vm735, %v695, -inf
    %v743 = vsel %vm735, %v698, -inf
    %v744 = vsel %vm735, %v703, -inf
    %v745 = vsel %vm735, %v706, -inf
    %v746 = vsel %vm735, %v711, -inf
    %v747 = vsel %vm735, %v714, -inf
    %v748 = vsel %vm735, %v719, -inf
    %v749 = vsel %vm735, %v722, -inf
    %v750 = vsel %vm735, %v727, -inf
    %v751 = vsel %vm735, %v730, -inf
    %752 = vmax.xlane.f32.xlu0 %v736
    %v753 = vpop.xlane.xlu0 %752
    %754 = vmax.xlane.f32.xlu0 %v737
    %v755 = vpop.xlane.xlu0 %754
    %756 = vmax.xlane.f32.xlu0 %v738
    %v757 = vpop.xlane.xlu0 %756
    %758 = vmax.xlane.f32.xlu0 %v739
    %v759 = vpop.xlane.xlu0 %758
    %760 = vmax.xlane.f32.xlu0 %v740
    %v761 = vpop.xlane.xlu0 %760
    %762 = vmax.xlane.f32.xlu0 %v741
    %v763 = vpop.xlane.xlu0 %762
    %764 = vmax.xlane.f32.xlu0 %v742
    %v765 = vpop.xlane.xlu0 %764
    %766 = vmax.xlane.f32.xlu0 %v743
    %v767 = vpop.xlane.xlu0 %766
    %768 = vmax.xlane.f32.xlu0 %v744
    %v769 = vpop.xlane.xlu0 %768
    %770 = vmax.xlane.f32.xlu0 %v745
    %v771 = vpop.xlane.xlu0 %770
    %772 = vmax.xlane.f32.xlu0 %v746
    %v773 = vpop.xlane.xlu0 %772
    %774 = vmax.xlane.f32.xlu0 %v747
    %v775 = vpop.xlane.xlu0 %774
    %776 = vmax.xlane.f32.xlu0 %v748
    %v777 = vpop.xlane.xlu0 %776
    %778 = vmax.xlane.f32.xlu0 %v749
    %v779 = vpop.xlane.xlu0 %778
    %780 = vmax.xlane.f32.xlu0 %v750
    %v781 = vpop.xlane.xlu0 %780
    %782 = vmax.xlane.f32.xlu0 %v751
    %v783 = vpop.xlane.xlu0 %782
    %v784 = vsub.f32 %v736, %v753
    %v785 = vsub.f32 %v737, %v755
    %v786 = vsub.f32 %v738, %v757
    %v787 = vsub.f32 %v739, %v759
    %v788 = vsub.f32 %v740, %v761
    %v789 = vsub.f32 %v741, %v763
    %v790 = vsub.f32 %v742, %v765
    %v791 = vsub.f32 %v743, %v767
    %v792 = vsub.f32 %v744, %v769
    %v793 = vsub.f32 %v745, %v771
    %v794 = vsub.f32 %v746, %v773
    %v795 = vsub.f32 %v747, %v775
    %v796 = vsub.f32 %v748, %v777
    %v797 = vsub.f32 %v749, %v779
    %v798 = vsub.f32 %v750, %v781
    %v799 = vsub.f32 %v751, %v783
    %v800 = vmul.f32 %v784, 1.442695
    %v801 = vpow.pop %v800
    %v802 = vmul.f32 %v785, 1.442695
    %v803 = vpow.pop %v802
    %v804 = vmul.f32 %v786, 1.442695
    %v805 = vpow.pop %v804
    %v806 = vmul.f32 %v787, 1.442695
    %v807 = vpow.pop %v806
    %v808 = vmul.f32 %v788, 1.442695
    %v809 = vpow.pop %v808
    %v810 = vmul.f32 %v789, 1.442695
    %v811 = vpow.pop %v810
    %v812 = vmul.f32 %v790, 1.442695
    %v813 = vpow.pop %v812
    %v814 = vmul.f32 %v791, 1.442695
    %v815 = vpow.pop %v814
    %v816 = vmul.f32 %v792, 1.442695
    %v817 = vpow.pop %v816
    %v818 = vmul.f32 %v793, 1.442695
    %v819 = vpow.pop %v818
    %v820 = vmul.f32 %v794, 1.442695
    %v821 = vpow.pop %v820
    %v822 = vmul.f32 %v795, 1.442695
    %v823 = vpow.pop %v822
    %v824 = vmul.f32 %v796, 1.442695
    %v825 = vpow.pop %v824
    %v826 = vmul.f32 %v797, 1.442695
    %v827 = vpow.pop %v826
    %v828 = vmul.f32 %v798, 1.442695
    %v829 = vpow.pop %v828
    %v830 = vmul.f32 %v799, 1.442695
    %v831 = vpow.pop %v830
    %832 = vadd.xlane.f32.xlu0 %v801
    %v833 = vpop.xlane.xlu0 %832
    %834 = vadd.xlane.f32.xlu0 %v803
    %v835 = vpop.xlane.xlu0 %834
    %836 = vadd.xlane.f32.xlu0 %v805
    %v837 = vpop.xlane.xlu0 %836
    %838 = vadd.xlane.f32.xlu0 %v807
    %v839 = vpop.xlane.xlu0 %838
    %840 = vadd.xlane.f32.xlu0 %v809
    %v841 = vpop.xlane.xlu0 %840
    %842 = vadd.xlane.f32.xlu0 %v811
    %v843 = vpop.xlane.xlu0 %842
    %844 = vadd.xlane.f32.xlu0 %v813
    %v845 = vpop.xlane.xlu0 %844
    %846 = vadd.xlane.f32.xlu0 %v815
    %v847 = vpop.xlane.xlu0 %846
    %848 = vadd.xlane.f32.xlu0 %v817
    %v849 = vpop.xlane.xlu0 %848
    %850 = vadd.xlane.f32.xlu0 %v819
    %v851 = vpop.xlane.xlu0 %850
    %852 = vadd.xlane.f32.xlu0 %v821
    %v853 = vpop.xlane.xlu0 %852
    %854 = vadd.xlane.f32.xlu0 %v823
    %v855 = vpop.xlane.xlu0 %854
    %856 = vadd.xlane.f32.xlu0 %v825
    %v857 = vpop.xlane.xlu0 %856
    %858 = vadd.xlane.f32.xlu0 %v827
    %v859 = vpop.xlane.xlu0 %858
    %860 = vadd.xlane.f32.xlu0 %v829
    %v861 = vpop.xlane.xlu0 %860
    %862 = vadd.xlane.f32.xlu0 %v831
    %v863 = vpop.xlane.xlu0 %862
    %v864 = vlog2.pop %v833
    %v865 = vmul.f32 %v864, 0.6931472
    %v866 = vlog2.pop %v835
    %v867 = vmul.f32 %v866, 0.6931472
    %v868 = vlog2.pop %v837
    %v869 = vmul.f32 %v868, 0.6931472
    %v870 = vlog2.pop %v839
    %v871 = vmul.f32 %v870, 0.6931472
    %v872 = vlog2.pop %v841
    %v873 = vmul.f32 %v872, 0.6931472
    %v874 = vlog2.pop %v843
    %v875 = vmul.f32 %v874, 0.6931472
    %v876 = vlog2.pop %v845
    %v877 = vmul.f32 %v876, 0.6931472
    %v878 = vlog2.pop %v847
    %v879 = vmul.f32 %v878, 0.6931472
    %v880 = vlog2.pop %v849
    %v881 = vmul.f32 %v880, 0.6931472
    %v882 = vlog2.pop %v851
    %v883 = vmul.f32 %v882, 0.6931472
    %v884 = vlog2.pop %v853
    %v885 = vmul.f32 %v884, 0.6931472
    %v886 = vlog2.pop %v855
    %v887 = vmul.f32 %v886, 0.6931472
    %v888 = vlog2.pop %v857
    %v889 = vmul.f32 %v888, 0.6931472
    %v890 = vlog2.pop %v859
    %v891 = vmul.f32 %v890, 0.6931472
    %v892 = vlog2.pop %v861
    %v893 = vmul.f32 %v892, 0.6931472
    %v894 = vlog2.pop %v863
    %v895 = vmul.f32 %v894, 0.6931472
    %v896 = vsub.f32 %v784, %v865
    %v897 = vsub.f32 %v785, %v867
    %v898 = vsub.f32 %v786, %v869
    %v899 = vsub.f32 %v787, %v871
    %v900 = vsub.f32 %v788, %v873
    %v901 = vsub.f32 %v789, %v875
    %v902 = vsub.f32 %v790, %v877
    %v903 = vsub.f32 %v791, %v879
    %v904 = vsub.f32 %v792, %v881
    %v905 = vsub.f32 %v793, %v883
    %v906 = vsub.f32 %v794, %v885
    %v907 = vsub.f32 %v795, %v887
    %v908 = vsub.f32 %v796, %v889
    %v909 = vsub.f32 %v797, %v891
    %v910 = vsub.f32 %v798, %v893
    %v911 = vsub.f32 %v799, %v895
    %912 = vst [vmem:[%s5] sm:$0xff] %v896
    %913 = vst [vmem:[%s5 + $0x8] sm:$0xff] %v897
    %914 = vst [vmem:[%s5 + $0x10] sm:$0xff] %v898
    %915 = vst [vmem:[%s5 + $0x18] sm:$0xff] %v899
    %916 = vst [vmem:[%s5 + $0x20] sm:$0xff] %v900
    %917 = vst [vmem:[%s5 + $0x28] sm:$0xff] %v901
    %918 = vst [vmem:[%s5 + $0x30] sm:$0xff] %v902
    %919 = vst [vmem:[%s5 + $0x38] sm:$0xff] %v903
    %920 = vst [vmem:[%s5 + $0x40] sm:$0xff] %v904
    %921 = vst [vmem:[%s5 + $0x48] sm:$0xff] %v905
    %922 = vst [vmem:[%s5 + $0x50] sm:$0xff] %v906
    %923 = vst [vmem:[%s5 + $0x58] sm:$0xff] %v907
    %924 = vst [vmem:[%s5 + $0x60] sm:$0xff] %v908
    %925 = vst [vmem:[%s5 + $0x68] sm:$0xff] %v909
    %926 = vst [vmem:[%s5 + $0x70] sm:$0xff] %v910
    %927 = vst [vmem:[%s5 + $0x78] sm:$0xff] %v911
  $region29: #{unignn_forward.7} parent=0 // pred_fallthru
    _
  // Predicated region
  $region30: #{unignn_forward.7} parent=0 // pred_check
    _
  $region31: #{unignn_forward.7} parent=0 // pred_check_branch
    %929 = sbr.rel (0) target = $region33
  $region32: #{unignn_forward.7} parent=0 // pred_region
    _
  $region33: #{unignn_forward.7} parent=0 // pred_fallthru
    _
  // Predicated region
  $region34: #{unignn_forward.7} parent=0 // pred_check
    _
  $region35: #{unignn_forward.7} parent=0 // pred_check_branch
    %931 = sbr.rel (0) target = $region37
  $region36: #{unignn_forward.7} parent=0 // pred_region
    _
  $region37: #{unignn_forward.7} parent=0 // pred_fallthru
    _

</llo_original>
